<compile_context>
chip_gen: v6e
topology: v6e:2x2x1
jax: 0.10.0
libtpu: 0.0.40
codegen_flags: <defaults>
</compile_context>

<pallas_src>
import functools

import jax
import jax.numpy as jnp
from jax.experimental import pallas as pl
from jax.experimental.pallas import tpu as pltpu


def _round_up(x, m):
    return (x + m - 1) // m * m


def _activate(y, act):
    if act == "tanh":
        return jnp.tanh(y)
    if act == "relu":
        return jnp.maximum(y, 0.0)
    return y


# ---------------------------------------------------------------------------
# Generation-aware VMEM ceiling (v5e/v6e: 128 MiB physical; v7x: 64 MiB/core)
# ---------------------------------------------------------------------------
def _vmem_ceiling_bytes():
    cap = None
    try:
        cap = int(getattr(pltpu.get_tpu_info(), "vmem_capacity_bytes"))
    except Exception:
        cap = None
    if cap is None:
        try:
            kind = jax.devices()[0].device_kind.lower()
        except Exception:
            kind = ""
        cap = 128 * 2**20 if ("v5" in kind or "v6" in kind) else 64 * 2**20
    if cap >= 128 * 2**20:
        return 100 * 2**20      # v5e / v6e: keep the fused, A-resident path longer
    return 48 * 2**20           # v7x: switch to the row-tiled path much earlier


def _pick_chunk(n_p):
    for tk in (512, 256, 128):
        if n_p % tk == 0:
            return tk
    return 128


# ---------------------------------------------------------------------------
# Fused kernel: all 4 layers in one pallas_call.
#   grid=(N_p//TK,): layer 1 streams A row-chunks (DMA overlapped with compute),
#   stashes them in a resident VMEM copy; last step runs layers 2-4 from VMEM.
# refs: a(chunk), x, w1,b1,...,w4,b4, out, a_vmem, h_vmem[, xw_vmem]
# ---------------------------------------------------------------------------
def _gcn_fused_kernel(a_ref, x_ref,
                      w1_ref, b1_ref, w2_ref, b2_ref, w3_ref, b3_ref,
                      w4_ref, b4_ref,
                      o_ref, a_vmem, h_vmem, *opt_scratch,
                      acts, l1_aggregate_first, orders_234):
    k = pl.program_id(0)
    nk = pl.num_programs(0)
    tk = a_ref.shape[0]
    row0 = pl.multiple_of(k * tk, tk)

    # --- layer 1, streamed over row chunks of A (bf16 end to end on the MXU) ----
    a_rows = a_ref[...]                                  # bf16 [TK, N_p]
    a_vmem[pl.ds(row0, tk), :] = a_rows                  # keep A resident for layers 2-4

    if l1_aggregate_first:
        # (A[rows,:] @ X) @ W1 -- better when padded F_out > padded F_in
        t = jnp.dot(a_rows, x_ref[...], preferred_element_type=jnp.float32)
        y = jnp.dot(t.astype(jnp.bfloat16), w1_ref[...],
                    preferred_element_type=jnp.float32)
    else:
        # A[rows,:] @ (X @ W1); X @ W1 computed once at step 0 into a bf16 scratch
        xw_vmem, = opt_scratch

        @pl.when(k == 0)
        def _xw():
            xw_vmem[...] = jnp.dot(x_ref[...], w1_ref[...],
                                   preferred_element_type=jnp.float32
                                   ).astype(jnp.bfloat16)

        y = jnp.dot(a_rows, xw_vmem[...], preferred_element_type=jnp.float32)

    # bias + activation on the f32 accumulator, then a SINGLE cast -> bf16 carry
    y = _activate(y + b1_ref[...], acts[0])
    h_vmem[pl.ds(row0, tk), :] = y.astype(jnp.bfloat16)

    # --- layers 2-4 once the whole adjacency is resident -------------------------
    @pl.when(k == nk - 1)
    def _rest():
        a_full = a_vmem[...]                             # bf16 [N_p, N_p]
        h = h_vmem[...]                                  # bf16 [N_p, F1_p]
        layer_refs = ((w2_ref, b2_ref), (w3_ref, b3_ref), (w4_ref, b4_ref))
        for li, (w_ref, b_ref) in enumerate(layer_refs):
            w = w_ref[...]
            if orders_234[li]:
                # aggregate first: (A @ H) @ W
                t = jnp.dot(a_full, h, preferred_element_type=jnp.float32)
                y = jnp.dot(t.astype(jnp.bfloat16), w,
                            preferred_element_type=jnp.float32)
            else:
                # transform first: A @ (H @ W)
                t = jnp.dot(h, w, preferred_element_type=jnp.float32)
                y = jnp.dot(a_full, t.astype(jnp.bfloat16),
                            preferred_element_type=jnp.float32)
            y = _activate(y + b_ref[...], acts[li + 1])
            if li < 2:
                h = y.astype(jnp.bfloat16)               # single cast per layer
            else:
                o_ref[...] = y.astype(o_ref.dtype)


def _fused_vmem_bytes(n_p, dims_p, tk):
    f0, f1, f4 = dims_p[0], dims_p[1], dims_p[4]
    b = n_p * n_p * 2                     # resident A scratch (bf16)
    b += 2 * n_p * f1 * 2                 # h scratch + optional X@W1 scratch (bf16)
    b += 2 * tk * n_p * 2                 # double-buffered streamed A row chunks
    b += 2 * n_p * f0 * 2                 # X block
    b += n_p * f4 * 4                     # resident output block (f32)
    for i in range(4):
        b += 2 * (dims_p[i] * dims_p[i + 1] * 2 + dims_p[i + 1] * 4)
    b += 4 * n_p * max(dims_p[1:]) * 4    # headroom for f32 intermediates (layers 2-4)
    return b


def _gcn_fused(a_p, x_p, wb, acts, dims_p, ceiling):
    n_p = a_p.shape[0]
    tk = _pick_chunk(n_p)
    nk = n_p // tk
    f0, f1, f4 = dims_p[0], dims_p[1], dims_p[4]

    # Matmul-order heuristic on PADDED dims (review item 8).
    l1_aggregate_first = f1 > f0
    orders_234 = tuple(dims_p[i + 1] > dims_p[i] for i in (1, 2, 3))

    scratch = [pltpu.VMEM((n_p, n_p), jnp.bfloat16),     # resident adjacency
               pltpu.VMEM((n_p, f1), jnp.bfloat16)]      # layer-1 activation carry
    if not l1_aggregate_first:
        scratch.append(pltpu.VMEM((n_p, f1), jnp.bfloat16))   # X @ W1 (computed once)

    flat_wb = [t for pair in wb for t in pair]
    in_specs = ([pl.BlockSpec((tk, n_p), lambda k: (k, 0)),    # streamed A row chunks
                 pl.BlockSpec((n_p, f0), lambda k: (0, 0))]    # X resident (tiny)
                + [pl.BlockSpec(t.shape, lambda k: (0, 0)) for t in flat_wb])

    # Cost estimate (padded FLOPs of the 8 matmuls + tanh).
    flops = 0
    for i in range(4):
        flops += 2 * n_p * n_p * min(dims_p[i], dims_p[i + 1])     # A-matmul
        flops += 2 * n_p * dims_p[i] * dims_p[i + 1]               # W-matmul
    transcendentals = n_p * f1
    bytes_accessed = (n_p * n_p * 2 + n_p * f0 * 2
                      + sum(int(t.size) * t.dtype.itemsize for t in flat_wb)
                      + n_p * f4 * 4)

    fused_bytes = _fused_vmem_bytes(n_p, dims_p, tk)
    vmem_limit = int(min(ceiling, max(32 * 2**20, int(fused_bytes * 1.25))))

    kernel = functools.partial(_gcn_fused_kernel, acts=acts,
                               l1_aggregate_first=l1_aggregate_first,
                               orders_234=orders_234)
    return pl.pallas_call(
        kernel,
        out_shape=jax.ShapeDtypeStruct((n_p, f4), jnp.float32),
        grid=(nk,),
        in_specs=in_specs,
        out_specs=pl.BlockSpec((n_p, f4), lambda k: (0, 0)),
        scratch_shapes=scratch,
        compiler_params=pltpu.CompilerParams(
            dimension_semantics=("arbitrary",),          # state carried across steps
            vmem_limit_bytes=vmem_limit),
        cost_estimate=pl.CostEstimate(flops=int(flops),
                                      transcendentals=int(transcendentals),
                                      bytes_accessed=int(bytes_accessed)),
    )(a_p, x_p, *flat_wb)


# ---------------------------------------------------------------------------
# Row-tiled fallback (A does not fit in VMEM / v7x): one pallas_call per layer,
# A tiled over rows, 'parallel' row axis (megacore), lane-dense 128-wide output,
# H/W/b as full resident blocks, aggregate-first => zero redundant work per tile.
# ---------------------------------------------------------------------------
def _gcn_layer_kernel(a_ref, h_ref, w_ref, b_ref, o_ref, *, act):
    t = jnp.dot(a_ref[...], h_ref[...], preferred_element_type=jnp.float32)
    y = jnp.dot(t.astype(jnp.bfloat16), w_ref[...], preferred_element_type=jnp.float32)
    y = _activate(y + b_ref[...], act)
    o_ref[...] = y.astype(o_ref.dtype)


def _gcn_row_tiled(a_p, x_p, wb, acts, ceiling):
    n_p = a_p.shape[0]
    tm = 256 if n_p % 256 == 0 else 128
    h = x_p
    for li, ((w_p, b_p), act) in enumerate(zip(wb, acts)):
        f_in_p, f_out_p = w_p.shape
        out_dtype = jnp.float32 if li == 3 else jnp.bfloat16
        need = (2 * tm * n_p * 2 + 2 * n_p * f_in_p * 2
                + 2 * (w_p.size * 2 + f_out_p * 4)
                + 2 * tm * f_out_p * 4 + 2 * tm * f_in_p * 4)
        vmem_limit = int(min(ceiling, max(32 * 2**20, need)))
        flops = 2 * n_p * n_p * f_in_p + 2 * n_p * f_in_p * f_out_p
        trans = n_p * f_out_p if act == "tanh" else 0
        h = pl.pallas_call(
            functools.partial(_gcn_layer_kernel, act=act),
            out_shape=jax.ShapeDtypeStruct((n_p, f_out_p), out_dtype),
            grid=(n_p // tm,),
            in_specs=[pl.BlockSpec((tm, n_p), lambda i: (i, 0)),
                      pl.BlockSpec((n_p, f_in_p), lambda i: (0, 0)),
                      pl.BlockSpec((f_in_p, f_out_p), lambda i: (0, 0)),
                      pl.BlockSpec((1, f_out_p), lambda i: (0, 0))],
            out_specs=pl.BlockSpec((tm, f_out_p), lambda i: (i, 0)),
            compiler_params=pltpu.CompilerParams(
                dimension_semantics=("parallel",),
                vmem_limit_bytes=vmem_limit),
            cost_estimate=pl.CostEstimate(
                flops=int(flops), transcendentals=int(trans),
                bytes_accessed=int(n_p * n_p * 2 + n_p * (f_in_p + f_out_p) * 2
                                   + w_p.size * 2)),
        )(a_p, h, w_p, b_p)
    return h


# ---------------------------------------------------------------------------
# Wrapper
# ---------------------------------------------------------------------------
def gcn_forward(prep, x, a_p, num_nodes, *, force_row_tiled=False):
    dims, dims_p, wb = prep["dims"], prep["dims_p"], prep["wb"]
    n_p = a_p.shape[0]
    num_classes = dims[4]
    acts = ("tanh", "relu", "relu", "none")

    # Pad node features (small, per-call); weights/adjacency were padded once.
    x_p = (jnp.zeros((n_p, dims_p[0]), jnp.float32)
           .at[:num_nodes, :dims[0]].set(x).astype(jnp.bfloat16))

    ceiling = _vmem_ceiling_bytes()
    fused_bytes = _fused_vmem_bytes(n_p, dims_p, _pick_chunk(n_p))
    if force_row_tiled or fused_bytes > ceiling:
        out_p = _gcn_row_tiled(a_p, x_p, wb, acts, ceiling)
    else:
        out_p = _gcn_fused(a_p, x_p, wb, acts, dims_p, ceiling)
    return out_p[:num_nodes, :num_classes]


# ---------------------------------------------------------------------------
# One-time preparation (hoisted out of the forward hot path)
# ---------------------------------------------------------------------------
def prepare_gcn_params(params, num_features):
    dims = [num_features] + [params[f"w{i}"].shape[1] for i in (1, 2, 3, 4)]
    dims_p = [_round_up(d, 128) for d in dims]
    wb = []
    for i in range(4):
        w, b = params[f"w{i + 1}"], params[f"b{i + 1}"]
        w_p = (jnp.zeros((dims_p[i], dims_p[i + 1]), jnp.float32)
               .at[:dims[i], :dims[i + 1]].set(w).astype(jnp.bfloat16))
        b_p = (jnp.zeros((1, dims_p[i + 1]), jnp.float32)
               .at[:, :dims[i + 1]].set(b[None, :]))
        wb.append((w_p, b_p))
    return {"wb": tuple(wb), "dims": tuple(dims), "dims_p": tuple(dims_p)}


def build_norm_adj_padded(edge_index, num_nodes):
    """Padded bf16 GCN-normalized adjacency, built once per graph.

    Matches PyG gcn_norm: add *remaining* self-loops (no double-count),
    D^{-1/2}(A+I)D^{-1/2}, messages flow source->target (A[dst, src] = 1).
    Padded rows/cols stay zero and never contaminate real rows.
    """
    n_p = _round_up(max(num_nodes, 1), 128)
    src, dst = edge_index[0], edge_index[1]
    a = jnp.zeros((n_p, n_p), jnp.float32).at[dst, src].add(1.0)
    diag = jnp.diagonal(a)
    need_loop = (diag == 0.0) & (jnp.arange(n_p) < num_nodes)
    a = a + jnp.diag(jnp.where(need_loop, 1.0, 0.0))
    deg = a.sum(axis=1)
    dinv = jnp.where(deg > 0, jax.lax.rsqrt(deg), 0.0)
    return (dinv[:, None] * a * dinv[None, :]).astype(jnp.bfloat16)


# ---------------------------------------------------------------------------
# Parameter init (Glorot-uniform weights, zero bias like PyG) + f32 reference
# ---------------------------------------------------------------------------
def _glorot(key, fan_in, fan_out):
    limit = jnp.sqrt(6.0 / (fan_in + fan_out))
    return jax.random.uniform(key, (fan_in, fan_out), jnp.float32, -limit, limit)


def init_gcn_params(key, num_features, num_classes, hidden_layers):
    dims = [num_features, hidden_layers, 100, 27, num_classes]
    keys = jax.random.split(key, 4)
    return {**{f"w{i + 1}": _glorot(keys[i], dims[i], dims[i + 1]) for i in range(4)},
            **{f"b{i + 1}": jnp.zeros((dims[i + 1],), jnp.float32) for i in range(4)}}


def gcn_forward_ref(params, x, a_norm):
    h = jnp.tanh(a_norm @ (x @ params["w1"]) + params["b1"])
    h = jnp.maximum(a_norm @ (h @ params["w2"]) + params["b2"], 0.0)
    h = jnp.maximum(a_norm @ (h @ params["w3"]) + params["b3"], 0.0)
    return a_norm @ (h @ params["w4"]) + params["b4"]


if __name__ == "__main__":
    key = jax.random.PRNGKey(0)
    k_x, k_params, k_x2 = jax.random.split(key, 3)

    num_features, hidden_layers, num_classes = 4, 32, 7
    params = init_gcn_params(k_params, num_features, num_classes, hidden_layers)
    prep = prepare_gcn_params(params, num_features)     # pad/cast weights ONCE

    def ring_edges(n):
        s = jnp.arange(n, dtype=jnp.int32)
        d = (s + 1) % n
        return jnp.stack([jnp.concatenate([s, d]), jnp.concatenate([d, s])], axis=0)

    # --- case A: shipped small graph (fused path, single A chunk) -------------
    n_a = 16
    x_a = jax.random.normal(k_x, (n_a, num_features), jnp.float32)
    a_a = build_norm_adj_padded(ring_edges(n_a), n_a)    # padded bf16, once per graph
    out_a = jax.block_until_ready(gcn_forward(prep, x_a, a_a, n_a))
    assert out_a.shape == (n_a, num_classes)
    ref_a = gcn_forward_ref(params, x_a, a_a[:n_a, :n_a].astype(jnp.float32))
    assert jnp.allclose(out_a, ref_a, rtol=5e-2, atol=5e-2)

    # --- case B: larger graph exercises the streamed layer-1 (3 chunks) and the
    #             row-tiled 'parallel' fallback path (grid of 3 row tiles) ------
    n_b = 300
    x_b = jax.random.normal(k_x2, (n_b, num_features), jnp.float32)
    a_b = build_norm_adj_padded(ring_edges(n_b), n_b)
    ref_b = gcn_forward_ref(params, x_b, a_b[:n_b, :n_b].astype(jnp.float32))
    out_fused = jax.block_until_ready(gcn_forward(prep, x_b, a_b, n_b))
    out_tiled = jax.block_until_ready(
        gcn_forward(prep, x_b, a_b, n_b, force_row_tiled=True))
    assert jnp.allclose(out_fused, ref_b, rtol=5e-2, atol=5e-2)
    assert jnp.allclose(out_tiled, ref_b, rtol=5e-2, atol=5e-2)

    print("KERNEL_OK")
</pallas_src>

<mosaic_0001>
module attributes {stable_mosaic.version = 11 : i64} {
  func.func @_gcn_fused_kernel(%arg0: i32, %arg1: memref<128x128xbf16, #tpu.memory_space<vmem>>, %arg2: memref<128x128xbf16, #tpu.memory_space<vmem>>, %arg3: memref<128x128xbf16, #tpu.memory_space<vmem>>, %arg4: memref<1x128xf32, #tpu.memory_space<vmem>>, %arg5: memref<128x128xbf16, #tpu.memory_space<vmem>>, %arg6: memref<1x128xf32, #tpu.memory_space<vmem>>, %arg7: memref<128x128xbf16, #tpu.memory_space<vmem>>, %arg8: memref<1x128xf32, #tpu.memory_space<vmem>>, %arg9: memref<128x128xbf16, #tpu.memory_space<vmem>>, %arg10: memref<1x128xf32, #tpu.memory_space<vmem>>, %arg11: memref<128x128xf32, #tpu.memory_space<vmem>>, %arg12: memref<128x128xbf16, #tpu.memory_space<vmem>>, %arg13: memref<128x128xbf16, #tpu.memory_space<vmem>>, %arg14: memref<128x128xbf16, #tpu.memory_space<vmem>>) attributes {dimension_semantics = [#tpu.dimension_semantics<arbitrary>], iteration_bounds = array<i64: 1>, scalar_prefetch = 0 : i64, scratch_operands = 3 : i64, tpu.core_type = #tpu.core_type<tc>, window_params = [{transform_indices = @transform_0, window_bounds = array<i64: 128, 128>}, {pipeline_mode = #tpu.pipeline_mode<synchronous>, transform_indices = @transform_1, window_bounds = array<i64: 128, 128>}, {pipeline_mode = #tpu.pipeline_mode<synchronous>, transform_indices = @transform_2, window_bounds = array<i64: 128, 128>}, {pipeline_mode = #tpu.pipeline_mode<synchronous>, transform_indices = @transform_3, window_bounds = array<i64: 1, 128>}, {pipeline_mode = #tpu.pipeline_mode<synchronous>, transform_indices = @transform_4, window_bounds = array<i64: 128, 128>}, {pipeline_mode = #tpu.pipeline_mode<synchronous>, transform_indices = @transform_5, window_bounds = array<i64: 1, 128>}, {pipeline_mode = #tpu.pipeline_mode<synchronous>, transform_indices = @transform_6, window_bounds = array<i64: 128, 128>}, {pipeline_mode = #tpu.pipeline_mode<synchronous>, transform_indices = @transform_7, window_bounds = array<i64: 1, 128>}, {pipeline_mode = #tpu.pipeline_mode<synchronous>, transform_indices = @transform_8, window_bounds = array<i64: 128, 128>}, {pipeline_mode = #tpu.pipeline_mode<synchronous>, transform_indices = @transform_9, window_bounds = array<i64: 1, 128>}, {pipeline_mode = #tpu.pipeline_mode<synchronous>, transform_indices = @transform_10, window_bounds = array<i64: 128, 128>}]} {
    %c128_i32 = arith.constant 128 : i32
    %0 = arith.muli %arg0, %c128_i32 : i32
    %1 = tpu.assume_multiple %0, 128 : i32
    %c0 = arith.constant 0 : index
    %c0_0 = arith.constant 0 : index
    %2 = vector.load %arg1[%c0, %c0_0] : memref<128x128xbf16, #tpu.memory_space<vmem>>, vector<128x128xbf16>
    %3 = arith.index_cast %1 : i32 to index
    %c0_1 = arith.constant 0 : index
    %4 = vector.load %arg12[%3, %c0_1] : memref<128x128xbf16, #tpu.memory_space<vmem>>, vector<128x128xbf16>
    tpu.vector_store %arg12[%3, %c0_1], %2 {strides = array<i32>} : memref<128x128xbf16, #tpu.memory_space<vmem>>, vector<128x128xbf16>,
    %c0_i32 = arith.constant 0 : i32
    %5 = arith.cmpi eq, %arg0, %c0_i32 : i32
    %6 = arith.extui %5 : i1 to i32
    %c0_i32_2 = arith.constant 0 : i32
    %7 = arith.cmpi ne, %6, %c0_i32_2 : i32
    scf.if %7 {
      %c0_10 = arith.constant 0 : index
      %c0_11 = arith.constant 0 : index
      %20 = vector.load %arg2[%c0_10, %c0_11] : memref<128x128xbf16, #tpu.memory_space<vmem>>, vector<128x128xbf16>
      %c0_12 = arith.constant 0 : index
      %c0_13 = arith.constant 0 : index
      %21 = vector.load %arg3[%c0_12, %c0_13] : memref<128x128xbf16, #tpu.memory_space<vmem>>, vector<128x128xbf16>
      %cst_14 = arith.constant dense<0.000000e+00> : vector<128x128xf32>
      %22 = tpu.matmul %20, %21, %cst_14 {dimension_numbers = #tpu.dot_dimension_numbers<[1], [0], [0], [1], [0, 0, 1, 1], [], []>} : vector<128x128xbf16>, vector<128x128xbf16>, vector<128x128xf32> -> vector<128x128xf32>
      %23 = arith.truncf %22 : vector<128x128xf32> to vector<128x128xbf16>
      %c0_15 = arith.constant 0 : index
      %c0_16 = arith.constant 0 : index
      %24 = vector.load %arg14[%c0_15, %c0_16] : memref<128x128xbf16, #tpu.memory_space<vmem>>, vector<128x128xbf16>
      tpu.vector_store %arg14[%c0_15, %c0_16], %23 {strides = array<i32>} : memref<128x128xbf16, #tpu.memory_space<vmem>>, vector<128x128xbf16>,
    } else {
    }
    %c0_3 = arith.constant 0 : index
    %c0_4 = arith.constant 0 : index
    %8 = vector.load %arg14[%c0_3, %c0_4] : memref<128x128xbf16, #tpu.memory_space<vmem>>, vector<128x128xbf16>
    %cst = arith.constant dense<0.000000e+00> : vector<128x128xf32>
    %9 = tpu.matmul %2, %8, %cst {dimension_numbers = #tpu.dot_dimension_numbers<[1], [0], [0], [1], [0, 0, 1, 1], [], []>} : vector<128x128xbf16>, vector<128x128xbf16>, vector<128x128xf32> -> vector<128x128xf32>
    %c0_5 = arith.constant 0 : index
    %c0_6 = arith.constant 0 : index
    %10 = vector.load %arg4[%c0_5, %c0_6] : memref<1x128xf32, #tpu.memory_space<vmem>>, vector<1x128xf32>
    %11 = vector.broadcast %10 : vector<1x128xf32> to vector<128x128xf32>
    %12 = arith.addf %9, %11 : vector<128x128xf32>
    %13 = math.tanh %12 : vector<128x128xf32>
    %14 = arith.truncf %13 : vector<128x128xf32> to vector<128x128xbf16>
    %15 = arith.index_cast %1 : i32 to index
    %c0_7 = arith.constant 0 : index
    %16 = vector.load %arg13[%15, %c0_7] : memref<128x128xbf16, #tpu.memory_space<vmem>>, vector<128x128xbf16>
    tpu.vector_store %arg13[%15, %c0_7], %14 {strides = array<i32>} : memref<128x128xbf16, #tpu.memory_space<vmem>>, vector<128x128xbf16>,
    %c0_i32_8 = arith.constant 0 : i32
    %17 = arith.cmpi eq, %arg0, %c0_i32_8 : i32
    %18 = arith.extui %17 : i1 to i32
    %c0_i32_9 = arith.constant 0 : i32
    %19 = arith.cmpi ne, %18, %c0_i32_9 : i32
    scf.if %19 {
      %c0_10 = arith.constant 0 : index
      %c0_11 = arith.constant 0 : index
      %20 = vector.load %arg12[%c0_10, %c0_11] : memref<128x128xbf16, #tpu.memory_space<vmem>>, vector<128x128xbf16>
      %c0_12 = arith.constant 0 : index
      %c0_13 = arith.constant 0 : index
      %21 = vector.load %arg13[%c0_12, %c0_13] : memref<128x128xbf16, #tpu.memory_space<vmem>>, vector<128x128xbf16>
      %c0_14 = arith.constant 0 : index
      %c0_15 = arith.constant 0 : index
      %22 = vector.load %arg5[%c0_14, %c0_15] : memref<128x128xbf16, #tpu.memory_space<vmem>>, vector<128x128xbf16>
      %cst_16 = arith.constant dense<0.000000e+00> : vector<128x128xf32>
      %23 = tpu.matmul %21, %22, %cst_16 {dimension_numbers = #tpu.dot_dimension_numbers<[1], [0], [0], [1], [0, 0, 1, 1], [], []>} : vector<128x128xbf16>, vector<128x128xbf16>, vector<128x128xf32> -> vector<128x128xf32>
      %24 = arith.truncf %23 : vector<128x128xf32> to vector<128x128xbf16>
      %cst_17 = arith.constant dense<0.000000e+00> : vector<128x128xf32>
      %25 = tpu.matmul %20, %24, %cst_17 {dimension_numbers = #tpu.dot_dimension_numbers<[1], [0], [0], [1], [0, 0, 1, 1], [], []>} : vector<128x128xbf16>, vector<128x128xbf16>, vector<128x128xf32> -> vector<128x128xf32>
      %c0_18 = arith.constant 0 : index
      %c0_19 = arith.constant 0 : index
      %26 = vector.load %arg6[%c0_18, %c0_19] : memref<1x128xf32, #tpu.memory_space<vmem>>, vector<1x128xf32>
      %27 = vector.broadcast %26 : vector<1x128xf32> to vector<128x128xf32>
      %28 = arith.addf %25, %27 : vector<128x128xf32>
      %cst_20 = arith.constant 0.000000e+00 : f32
      %29 = vector.broadcast %cst_20 : f32 to vector<128x128xf32>
      %30 = arith.maximumf %28, %29 : vector<128x128xf32>
      %31 = arith.truncf %30 : vector<128x128xf32> to vector<128x128xbf16>
      %c0_21 = arith.constant 0 : index
      %c0_22 = arith.constant 0 : index
      %32 = vector.load %arg7[%c0_21, %c0_22] : memref<128x128xbf16, #tpu.memory_space<vmem>>, vector<128x128xbf16>
      %cst_23 = arith.constant dense<0.000000e+00> : vector<128x128xf32>
      %33 = tpu.matmul %31, %32, %cst_23 {dimension_numbers = #tpu.dot_dimension_numbers<[1], [0], [0], [1], [0, 0, 1, 1], [], []>} : vector<128x128xbf16>, vector<128x128xbf16>, vector<128x128xf32> -> vector<128x128xf32>
      %34 = arith.truncf %33 : vector<128x128xf32> to vector<128x128xbf16>
      %cst_24 = arith.constant dense<0.000000e+00> : vector<128x128xf32>
      %35 = tpu.matmul %20, %34, %cst_24 {dimension_numbers = #tpu.dot_dimension_numbers<[1], [0], [0], [1], [0, 0, 1, 1], [], []>} : vector<128x128xbf16>, vector<128x128xbf16>, vector<128x128xf32> -> vector<128x128xf32>
      %c0_25 = arith.constant 0 : index
      %c0_26 = arith.constant 0 : index
      %36 = vector.load %arg8[%c0_25, %c0_26] : memref<1x128xf32, #tpu.memory_space<vmem>>, vector<1x128xf32>
      %37 = vector.broadcast %36 : vector<1x128xf32> to vector<128x128xf32>
      %38 = arith.addf %35, %37 : vector<128x128xf32>
      %cst_27 = arith.constant 0.000000e+00 : f32
      %39 = vector.broadcast %cst_27 : f32 to vector<128x128xf32>
      %40 = arith.maximumf %38, %39 : vector<128x128xf32>
      %41 = arith.truncf %40 : vector<128x128xf32> to vector<128x128xbf16>
      %c0_28 = arith.constant 0 : index
      %c0_29 = arith.constant 0 : index
      %42 = vector.load %arg9[%c0_28, %c0_29] : memref<128x128xbf16, #tpu.memory_space<vmem>>, vector<128x128xbf16>
      %cst_30 = arith.constant dense<0.000000e+00> : vector<128x128xf32>
      %43 = tpu.matmul %41, %42, %cst_30 {dimension_numbers = #tpu.dot_dimension_numbers<[1], [0], [0], [1], [0, 0, 1, 1], [], []>} : vector<128x128xbf16>, vector<128x128xbf16>, vector<128x128xf32> -> vector<128x128xf32>
      %44 = arith.truncf %43 : vector<128x128xf32> to vector<128x128xbf16>
      %cst_31 = arith.constant dense<0.000000e+00> : vector<128x128xf32>
      %45 = tpu.matmul %20, %44, %cst_31 {dimension_numbers = #tpu.dot_dimension_numbers<[1], [0], [0], [1], [0, 0, 1, 1], [], []>} : vector<128x128xbf16>, vector<128x128xbf16>, vector<128x128xf32> -> vector<128x128xf32>
      %c0_32 = arith.constant 0 : index
      %c0_33 = arith.constant 0 : index
      %46 = vector.load %arg10[%c0_32, %c0_33] : memref<1x128xf32, #tpu.memory_space<vmem>>, vector<1x128xf32>
      %47 = vector.broadcast %46 : vector<1x128xf32> to vector<128x128xf32>
      %48 = arith.addf %45, %47 : vector<128x128xf32>
      %c0_34 = arith.constant 0 : index
      %c0_35 = arith.constant 0 : index
      %49 = vector.load %arg11[%c0_34, %c0_35] : memref<128x128xf32, #tpu.memory_space<vmem>>, vector<128x128xf32>
      tpu.vector_store %arg11[%c0_34, %c0_35], %48 {strides = array<i32>} : memref<128x128xf32, #tpu.memory_space<vmem>>, vector<128x128xf32>,
    } else {
    }
    return
  }
  func.func @transform_0(%arg0: i32) -> (i32, i32) {
    %c0_i32 = arith.constant 0 : i32
    %c0_i32_0 = arith.constant 0 : i32
    return %arg0, %c0_i32 : i32, i32
  }
  func.func @transform_1(%arg0: i32) -> (i32, i32) {
    %c0_i32 = arith.constant 0 : i32
    %c0_i32_0 = arith.constant 0 : i32
    %c0_i32_1 = arith.constant 0 : i32
    return %c0_i32, %c0_i32_0 : i32, i32
  }
  func.func @transform_2(%arg0: i32) -> (i32, i32) {
    %c0_i32 = arith.constant 0 : i32
    %c0_i32_0 = arith.constant 0 : i32
    %c0_i32_1 = arith.constant 0 : i32
    return %c0_i32, %c0_i32_0 : i32, i32
  }
  func.func @transform_3(%arg0: i32) -> (i32, i32) {
    %c0_i32 = arith.constant 0 : i32
    %c0_i32_0 = arith.constant 0 : i32
    %c0_i32_1 = arith.constant 0 : i32
    return %c0_i32, %c0_i32_0 : i32, i32
  }
  func.func @transform_4(%arg0: i32) -> (i32, i32) {
    %c0_i32 = arith.constant 0 : i32
    %c0_i32_0 = arith.constant 0 : i32
    %c0_i32_1 = arith.constant 0 : i32
    return %c0_i32, %c0_i32_0 : i32, i32
  }
  func.func @transform_5(%arg0: i32) -> (i32, i32) {
    %c0_i32 = arith.constant 0 : i32
    %c0_i32_0 = arith.constant 0 : i32
    %c0_i32_1 = arith.constant 0 : i32
    return %c0_i32, %c0_i32_0 : i32, i32
  }
  func.func @transform_6(%arg0: i32) -> (i32, i32) {
    %c0_i32 = arith.constant 0 : i32
    %c0_i32_0 = arith.constant 0 : i32
    %c0_i32_1 = arith.constant 0 : i32
    return %c0_i32, %c0_i32_0 : i32, i32
  }
  func.func @transform_7(%arg0: i32) -> (i32, i32) {
    %c0_i32 = arith.constant 0 : i32
    %c0_i32_0 = arith.constant 0 : i32
    %c0_i32_1 = arith.constant 0 : i32
    return %c0_i32, %c0_i32_0 : i32, i32
  }
  func.func @transform_8(%arg0: i32) -> (i32, i32) {
    %c0_i32 = arith.constant 0 : i32
    %c0_i32_0 = arith.constant 0 : i32
    %c0_i32_1 = arith.constant 0 : i32
    return %c0_i32, %c0_i32_0 : i32, i32
  }
  func.func @transform_9(%arg0: i32) -> (i32, i32) {
    %c0_i32 = arith.constant 0 : i32
    %c0_i32_0 = arith.constant 0 : i32
    %c0_i32_1 = arith.constant 0 : i32
    return %c0_i32, %c0_i32_0 : i32, i32
  }
  func.func @transform_10(%arg0: i32) -> (i32, i32) {
    %c0_i32 = arith.constant 0 : i32
    %c0_i32_0 = arith.constant 0 : i32
    %c0_i32_1 = arith.constant 0 : i32
    return %c0_i32, %c0_i32_0 : i32, i32
  }
}

</mosaic_0001>

<llo_original>
// kernel: tpu_custom_call.1
$region0: #{tpu_custom_call.1}
  #allocation0 [shape = 'u32[]', space=smem, size = 0x4, offset = 0x4, fixed_abs, tag = 'smem constant byte address 0x4 - core index']
  #allocation1 [shape = 'u32[144,128]{1,0:T(1,128)}', space=vmem, size = 0x12000, scoped, tag = 'internal scratch']
  #allocation2 [shape = 'bf16[128,128]{1,0:T(8,128)(2,1)}', space=vmem, size = 0x8000, scoped, tag = 'scratch operand']
  #allocation3 [shape = 'bf16[128,128]{1,0:T(8,128)(2,1)}', space=vmem, size = 0x8000, scoped, tag = 'scratch operand']
  #allocation4 [shape = 'bf16[128,128]{1,0:T(8,128)(2,1)}', space=vmem, size = 0x8000, scoped, tag = 'scratch operand']
  %s0 = inlined_call_operand.hbm [shape: bf16[128,128], index: 0, kind: input, shape index: {}]
  %s1 = inlined_call_operand.hbm [shape: bf16[128,128], index: 1, kind: input, shape index: {}]
  %s2 = inlined_call_operand.hbm [shape: bf16[128,128], index: 2, kind: input, shape index: {}]
  %s3 = inlined_call_operand.vmem [shape: f32[1,128], index: 3, kind: input, shape index: {}]
  %s4 = inlined_call_operand.hbm [shape: bf16[128,128], index: 4, kind: input, shape index: {}]
  %s5 = inlined_call_operand.vmem [shape: f32[1,128], index: 5, kind: input, shape index: {}]
  %s6 = inlined_call_operand.hbm [shape: bf16[128,128], index: 6, kind: input, shape index: {}]
  %s7 = inlined_call_operand.vmem [shape: f32[1,128], index: 7, kind: input, shape index: {}]
  %s8 = inlined_call_operand.hbm [shape: bf16[128,128], index: 8, kind: input, shape index: {}]
  %s9 = inlined_call_operand.vmem [shape: f32[1,128], index: 9, kind: input, shape index: {}]
  %s10 = inlined_call_operand.hbm [shape: f32[128,128], index: 10, kind: output, shape index: {}]
  %s11 = sld [smem:[#allocation0]]
  $region82: #{tpu_custom_call.1} parent=0
    _
  %s13 = ssub.s32 1, %s11
  %s14 = scalar_select 0, %s13, %s11
  $region1: #{tpu_custom_call.1} parent=0
    #allocation5 [shape = 'u8[32768]{0}', space=vmem, size = 0x8000, scoped, tag = 'input window, operand 0, single buffered']
    #allocation6 [shape = 's32[1]{0}', space=sflag, size = 0x4, scoped, tag = 'scoped memory for tpu_custom_call.1']
    #allocation7 [shape = 's32[1]{0}', space=sflag, size = 0x4, scoped, tag = 'scoped memory for tpu_custom_call.1']
    #allocation8 [shape = 'u8[32768]{0}', space=vmem, size = 0x8000, scoped, tag = 'input window, operand 1, single buffered']
    #allocation9 [shape = 's32[1]{0}', space=sflag, size = 0x4, scoped, tag = 'scoped memory for tpu_custom_call.1']
    #allocation10 [shape = 'u8[32768]{0}', space=vmem, size = 0x8000, scoped, tag = 'input window, operand 2, single buffered']
    #allocation11 [shape = 'u8[32768]{0}', space=vmem, size = 0x8000, scoped, tag = 'input window, operand 4, single buffered']
    #allocation12 [shape = 's32[1]{0}', space=sflag, size = 0x4, scoped, tag = 'scoped memory for tpu_custom_call.1']
    #allocation13 [shape = 'u8[32768]{0}', space=vmem, size = 0x8000, scoped, tag = 'input window, operand 6, single buffered']
    #allocation14 [shape = 'u8[32768]{0}', space=vmem, size = 0x8000, scoped, tag = 'input window, operand 8, single buffered']
    #allocation15 [shape = 's32[1]{0}', space=sflag, size = 0x4, scoped, tag = 'scoped memory for tpu_custom_call.1']
    #allocation16 [shape = 'u8[65536]{0}', space=vmem, size = 0x10000, scoped, tag = 'output window, operand 0, single buffered']
    %15 = vsyncpa [#allocation6], 0
    %16 = vsyncpa [#allocation9], 0
    %17 = vsyncpa [#allocation12], 0
    %18 = vsyncpa [#allocation15], 0
    %19 = vsyncpa [#allocation7], 0
    // Predicated region
    $region2: #{tpu_custom_call.1} parent=1 // pred_check
      _
    $region3: #{tpu_custom_call.1} parent=1 // pred_check_branch
      %21 = sbr.rel (0) target = $region5
    $region4: #{tpu_custom_call.1} parent=1 // pred_region
      %s23 = ssub.s32 1024, 1024
      %24 = vsyncadd [#allocation6], %s23
      %s25 = sshll.u32 [#allocation5], 4
      %s26 = int_to_ptr.vmem [resolvable:$true] %s25
      %31 = dma.hbm_to_vmem [thread:$0]  %s0, 1024, %s26, [#allocation6], 64, 64, 4
    $region5: #{tpu_custom_call.1} parent=1 // pred_fallthru
      _
    // Predicated region
    $region6: #{tpu_custom_call.1} parent=1 // pred_check
      _
    $region7: #{tpu_custom_call.1} parent=1 // pred_check_branch
      %33 = sbr.rel (0) target = $region9
    $region8: #{tpu_custom_call.1} parent=1 // pred_region
      %s35 = ssub.s32 1024, 1024
      %36 = vsyncadd [#allocation9], %s35
      %s37 = sshll.u32 [#allocation8], 4
      %s38 = int_to_ptr.vmem [resolvable:$true] %s37
      %43 = dma.hbm_to_vmem [thread:$0]  %s1, 1024, %s38, [#allocation9], 64, 64, 4
    $region9: #{tpu_custom_call.1} parent=1 // pred_fallthru
      _
    // Predicated region
    $region10: #{tpu_custom_call.1} parent=1 // pred_check
      _
    $region11: #{tpu_custom_call.1} parent=1 // pred_check_branch
      %45 = sbr.rel (0) target = $region13
    $region12: #{tpu_custom_call.1} parent=1 // pred_region
      %s47 = ssub.s32 1024, 1024
      %48 = vsyncadd [#allocation9], %s47
      %s49 = sshll.u32 [#allocation10], 4
      %s50 = int_to_ptr.vmem [resolvable:$true] %s49
      %55 = dma.hbm_to_vmem [thread:$0]  %s2, 1024, %s50, [#allocation9], 64, 64, 4
    $region13: #{tpu_custom_call.1} parent=1 // pred_fallthru
      _
    // Predicated region
    $region14: #{tpu_custom_call.1} parent=1 // pred_check
      _
    $region15: #{tpu_custom_call.1} parent=1 // pred_check_branch
      %57 = sbr.rel (0) target = $region17
    $region16: #{tpu_custom_call.1} parent=1 // pred_region
      _
    $region17: #{tpu_custom_call.1} parent=1 // pred_fallthru
      _
    // Predicated region
    $region18: #{tpu_custom_call.1} parent=1 // pred_check
      _
    $region19: #{tpu_custom_call.1} parent=1 // pred_check_branch
      %59 = sbr.rel (0) target = $region21
    $region20: #{tpu_custom_call.1} parent=1 // pred_region
      %s61 = ssub.s32 1024, 1024
      %62 = vsyncadd [#allocation12], %s61
      %s63 = sshll.u32 [#allocation11], 4
      %s64 = int_to_ptr.vmem [resolvable:$true] %s63
      %69 = dma.hbm_to_vmem [thread:$0]  %s4, 1024, %s64, [#allocation12], 64, 64, 4
    $region21: #{tpu_custom_call.1} parent=1 // pred_fallthru
      _
    // Predicated region
    $region22: #{tpu_custom_call.1} parent=1 // pred_check
      _
    $region23: #{tpu_custom_call.1} parent=1 // pred_check_branch
      %71 = sbr.rel (0) target = $region25
    $region24: #{tpu_custom_call.1} parent=1 // pred_region
      _
    $region25: #{tpu_custom_call.1} parent=1 // pred_fallthru
      _
    // Predicated region
    $region26: #{tpu_custom_call.1} parent=1 // pred_check
      _
    $region27: #{tpu_custom_call.1} parent=1 // pred_check_branch
      %73 = sbr.rel (0) target = $region29
    $region28: #{tpu_custom_call.1} parent=1 // pred_region
      %s75 = ssub.s32 1024, 1024
      %76 = vsyncadd [#allocation12], %s75
      %s77 = sshll.u32 [#allocation13], 4
      %s78 = int_to_ptr.vmem [resolvable:$true] %s77
      %83 = dma.hbm_to_vmem [thread:$0]  %s6, 1024, %s78, [#allocation12], 64, 64, 4
    $region29: #{tpu_custom_call.1} parent=1 // pred_fallthru
      _
    // Predicated region
    $region30: #{tpu_custom_call.1} parent=1 // pred_check
      _
    $region31: #{tpu_custom_call.1} parent=1 // pred_check_branch
      %85 = sbr.rel (0) target = $region33
    $region32: #{tpu_custom_call.1} parent=1 // pred_region
      _
    $region33: #{tpu_custom_call.1} parent=1 // pred_fallthru
      _
    // Predicated region
    $region34: #{tpu_custom_call.1} parent=1 // pred_check
      _
    $region35: #{tpu_custom_call.1} parent=1 // pred_check_branch
      %87 = sbr.rel (0) target = $region37
    $region36: #{tpu_custom_call.1} parent=1 // pred_region
      %s89 = ssub.s32 1024, 1024
      %90 = vsyncadd [#allocation15], %s89
      %s91 = sshll.u32 [#allocation14], 4
      %s92 = int_to_ptr.vmem [resolvable:$true] %s91
      %97 = dma.hbm_to_vmem [thread:$0]  %s8, 1024, %s92, [#allocation15], 64, 64, 4
    $region37: #{tpu_custom_call.1} parent=1 // pred_fallthru
      _
    // Predicated region
    $region38: #{tpu_custom_call.1} parent=1 // pred_check
      _
    $region39: #{tpu_custom_call.1} parent=1 // pred_check_branch
      %99 = sbr.rel (0) target = $region41
    $region40: #{tpu_custom_call.1} parent=1 // pred_region
      _
    $region41: #{tpu_custom_call.1} parent=1 // pred_fallthru
      _
    // Predicated region
    $region42: #{tpu_custom_call.1} parent=1 // pred_check
      _
    $region43: #{tpu_custom_call.1} parent=1 // pred_check_branch
      %101 = sbr.rel (0) target = $region45
    $region44: #{tpu_custom_call.1} parent=1 // pred_region
      %102 = dma.done [#allocation6], 1024
    $region45: #{tpu_custom_call.1} parent=1 // pred_fallthru
      _
    // Predicated region
    $region46: #{tpu_custom_call.1} parent=1 // pred_check
      _
    $region47: #{tpu_custom_call.1} parent=1 // pred_check_branch
      %104 = sbr.rel (0) target = $region49
    $region48: #{tpu_custom_call.1} parent=1 // pred_region
      %105 = dma.done [#allocation9], 1024
    $region49: #{tpu_custom_call.1} parent=1 // pred_fallthru
      _
    // Predicated region
    $region50: #{tpu_custom_call.1} parent=1 // pred_check
      _
    $region51: #{tpu_custom_call.1} parent=1 // pred_check_branch
      %107 = sbr.rel (0) target = $region53
    $region52: #{tpu_custom_call.1} parent=1 // pred_region
      %108 = dma.done [#allocation9], 1024
    $region53: #{tpu_custom_call.1} parent=1 // pred_fallthru
      _
    // Predicated region
    $region54: #{tpu_custom_call.1} parent=1 // pred_check
      _
    $region55: #{tpu_custom_call.1} parent=1 // pred_check_branch
      %110 = sbr.rel (0) target = $region57
    $region56: #{tpu_custom_call.1} parent=1 // pred_region
      %111 = dma.done [#allocation12], 1024
    $region57: #{tpu_custom_call.1} parent=1 // pred_fallthru
      _
    // Predicated region
    $region58: #{tpu_custom_call.1} parent=1 // pred_check
      _
    $region59: #{tpu_custom_call.1} parent=1 // pred_check_branch
      %113 = sbr.rel (0) target = $region61
    $region60: #{tpu_custom_call.1} parent=1 // pred_region
      %114 = dma.done [#allocation12], 1024
    $region61: #{tpu_custom_call.1} parent=1 // pred_fallthru
      _
    // Predicated region
    $region62: #{tpu_custom_call.1} parent=1 // pred_check
      _
    $region63: #{tpu_custom_call.1} parent=1 // pred_check_branch
      %116 = sbr.rel (0) target = $region65
    $region64: #{tpu_custom_call.1} parent=1 // pred_region
      %117 = dma.done [#allocation15], 1024
    $region65: #{tpu_custom_call.1} parent=1 // pred_fallthru
      _
    %s119 = smul.u32 0, 128
    %v120 = vld [vmem:[#allocation5] sm:$0xf]
    %v121 = vld [vmem:[#allocation5 + $0x4] sm:$0xf]
    %v122 = vld [vmem:[#allocation5 + $0x8] sm:$0xf]
    %v123 = vld [vmem:[#allocation5 + $0xc] sm:$0xf]
    %v124 = vld [vmem:[#allocation5 + $0x10] sm:$0xf]
    %v125 = vld [vmem:[#allocation5 + $0x14] sm:$0xf]
    %v126 = vld [vmem:[#allocation5 + $0x18] sm:$0xf]
    %v127 = vld [vmem:[#allocation5 + $0x1c] sm:$0xf]
    %v128 = vld [vmem:[#allocation5 + $0x20] sm:$0xf]
    %v129 = vld [vmem:[#allocation5 + $0x24] sm:$0xf]
    %v130 = vld [vmem:[#allocation5 + $0x28] sm:$0xf]
    %v131 = vld [vmem:[#allocation5 + $0x2c] sm:$0xf]
    %v132 = vld [vmem:[#allocation5 + $0x30] sm:$0xf]
    %v133 = vld [vmem:[#allocation5 + $0x34] sm:$0xf]
    %v134 = vld [vmem:[#allocation5 + $0x38] sm:$0xf]
    %v135 = vld [vmem:[#allocation5 + $0x3c] sm:$0xf]
    %s136 = sshra.s32 %s119, 3
    %s137 = sand.u32 %s119, 7
    %s138 = smul.addr %s136, 4
    %s139 = scalar_lea.vmem [#allocation2], %s138
    %140 = vst [vmem:[%s139] sm:$0xf] %v120
    %141 = vst [vmem:[%s139 + $0x4] sm:$0xf] %v121
    %142 = vst [vmem:[%s139 + $0x8] sm:$0xf] %v122
    %143 = vst [vmem:[%s139 + $0xc] sm:$0xf] %v123
    %144 = vst [vmem:[%s139 + $0x10] sm:$0xf] %v124
    %145 = vst [vmem:[%s139 + $0x14] sm:$0xf] %v125
    %146 = vst [vmem:[%s139 + $0x18] sm:$0xf] %v126
    %147 = vst [vmem:[%s139 + $0x1c] sm:$0xf] %v127
    %148 = vst [vmem:[%s139 + $0x20] sm:$0xf] %v128
    %149 = vst [vmem:[%s139 + $0x24] sm:$0xf] %v129
    %150 = vst [vmem:[%s139 + $0x28] sm:$0xf] %v130
    %151 = vst [vmem:[%s139 + $0x2c] sm:$0xf] %v131
    %152 = vst [vmem:[%s139 + $0x30] sm:$0xf] %v132
    %153 = vst [vmem:[%s139 + $0x34] sm:$0xf] %v133
    %154 = vst [vmem:[%s139 + $0x38] sm:$0xf] %v134
    %155 = vst [vmem:[%s139 + $0x3c] sm:$0xf] %v135
    %p156 = scmp.eq.s32.totalorder 0, 0
    // Predicated region
    $region66: #{tpu_custom_call.1} parent=1 // pred_check
      %p157 = pneg %p156
    $region67: #{tpu_custom_call.1} parent=1 // pred_check_branch
      %159 = sbr.rel (%p157) target = $region69
    $region68: #{tpu_custom_call.1} parent=1 // pred_region
      %v160 = vld [vmem:[#allocation8] sm:$0xf]
      %v161 = vld [vmem:[#allocation8 + $0x4] sm:$0xf]
      %v162 = vld [vmem:[#allocation8 + $0x8] sm:$0xf]
      %v163 = vld [vmem:[#allocation8 + $0xc] sm:$0xf]
      %v164 = vld [vmem:[#allocation8 + $0x10] sm:$0xf]
      %v165 = vld [vmem:[#allocation8 + $0x14] sm:$0xf]
      %v166 = vld [vmem:[#allocation8 + $0x18] sm:$0xf]
      %v167 = vld [vmem:[#allocation8 + $0x1c] sm:$0xf]
      %v168 = vld [vmem:[#allocation8 + $0x20] sm:$0xf]
      %v169 = vld [vmem:[#allocation8 + $0x24] sm:$0xf]
      %v170 = vld [vmem:[#allocation8 + $0x28] sm:$0xf]
      %v171 = vld [vmem:[#allocation8 + $0x2c] sm:$0xf]
      %v172 = vld [vmem:[#allocation8 + $0x30] sm:$0xf]
      %v173 = vld [vmem:[#allocation8 + $0x34] sm:$0xf]
      %v174 = vld [vmem:[#allocation8 + $0x38] sm:$0xf]
      %v175 = vld [vmem:[#allocation8 + $0x3c] sm:$0xf]
      %v176 = vld [vmem:[#allocation10] sm:$0xf]
      %v177 = vld [vmem:[#allocation10 + $0x4] sm:$0xf]
      %v178 = vld [vmem:[#allocation10 + $0x8] sm:$0xf]
      %v179 = vld [vmem:[#allocation10 + $0xc] sm:$0xf]
      %v180 = vld [vmem:[#allocation10 + $0x10] sm:$0xf]
      %v181 = vld [vmem:[#allocation10 + $0x14] sm:$0xf]
      %v182 = vld [vmem:[#allocation10 + $0x18] sm:$0xf]
      %v183 = vld [vmem:[#allocation10 + $0x1c] sm:$0xf]
      %v184 = vld [vmem:[#allocation10 + $0x20] sm:$0xf]
      %v185 = vld [vmem:[#allocation10 + $0x24] sm:$0xf]
      %v186 = vld [vmem:[#allocation10 + $0x28] sm:$0xf]
      %v187 = vld [vmem:[#allocation10 + $0x2c] sm:$0xf]
      %v188 = vld [vmem:[#allocation10 + $0x30] sm:$0xf]
      %v189 = vld [vmem:[#allocation10 + $0x34] sm:$0xf]
      %v190 = vld [vmem:[#allocation10 + $0x38] sm:$0xf]
      %v191 = vld [vmem:[#allocation10 + $0x3c] sm:$0xf]
      %v208 = vunpack.c.l.b16 %v160
      %v209 = vunpack.c.l.b16 %v161
      %v210 = vunpack.c.l.b16 %v162
      %v211 = vunpack.c.l.b16 %v163
      %v212 = vunpack.c.l.b16 %v164
      %v213 = vunpack.c.l.b16 %v165
      %v214 = vunpack.c.l.b16 %v166
      %v215 = vunpack.c.l.b16 %v167
      %v216 = vunpack.c.l.b16 %v168
      %v217 = vunpack.c.l.b16 %v169
      %v218 = vunpack.c.l.b16 %v170
      %v219 = vunpack.c.l.b16 %v171
      %v220 = vunpack.c.l.b16 %v172
      %v221 = vunpack.c.l.b16 %v173
      %v222 = vunpack.c.l.b16 %v174
      %v223 = vunpack.c.l.b16 %v175
      %v224 = vpack.c.b16 %v209, %v208
      %v225 = vpack.c.b16 %v211, %v210
      %v226 = vpack.c.b16 %v213, %v212
      %v227 = vpack.c.b16 %v215, %v214
      %v228 = vpack.c.b16 %v217, %v216
      %v229 = vpack.c.b16 %v219, %v218
      %v230 = vpack.c.b16 %v221, %v220
      %v231 = vpack.c.b16 %v223, %v222
      %v256 = vunpack.c.l.b16 %v176
      %v257 = vunpack.c.l.b16 %v177
      %v258 = vunpack.c.l.b16 %v178
      %v259 = vunpack.c.l.b16 %v179
      %v260 = vunpack.c.l.b16 %v180
      %v261 = vunpack.c.l.b16 %v181
      %v262 = vunpack.c.l.b16 %v182
      %v263 = vunpack.c.l.b16 %v183
      %v264 = vunpack.c.l.b16 %v184
      %v265 = vunpack.c.l.b16 %v185
      %v266 = vunpack.c.l.b16 %v186
      %v267 = vunpack.c.l.b16 %v187
      %v268 = vunpack.c.l.b16 %v188
      %v269 = vunpack.c.l.b16 %v189
      %v270 = vunpack.c.l.b16 %v190
      %v271 = vunpack.c.l.b16 %v191
      %v272 = vpack.c.b16 %v257, %v256
      %v273 = vpack.c.b16 %v259, %v258
      %v274 = vpack.c.b16 %v261, %v260
      %v275 = vpack.c.b16 %v263, %v262
      %v276 = vpack.c.b16 %v265, %v264
      %v277 = vpack.c.b16 %v267, %v266
      %v278 = vpack.c.b16 %v269, %v268
      %v279 = vpack.c.b16 %v271, %v270
      %288 = vmatprep.subr.bf16.mxu0 0
      %289 = vmatpush1.bf16.msra.mxu0 %v279
      %290 = vmatprep.subr.bf16.mxu0 0
      %291 = vmatpush1.bf16.msra.mxu0 %v278
      %292 = vmatprep.subr.bf16.mxu0 0
      %293 = vmatpush1.bf16.msra.mxu0 %v277
      %294 = vmatprep.subr.bf16.mxu0 0
      %295 = vmatpush1.bf16.msra.mxu0 %v276
      %296 = vmatprep.subr.bf16.mxu0 0
      %297 = vmatpush1.bf16.msra.mxu0 %v275
      %298 = vmatprep.subr.bf16.mxu0 0
      %299 = vmatpush1.bf16.msra.mxu0 %v274
      %300 = vmatprep.subr.bf16.mxu0 0
      %301 = vmatpush1.bf16.msra.mxu0 %v273
      %302 = vmatprep.subr.bf16.mxu0 0
      %303 = vmatpush1.bf16.msra.mxu0 %v272
      %304 = vmatprep.subr.bf16.mxu0 0
      %305 = vmatpush2.bf16.msra.mxu0 0
      %306 = vmatprep.subr.bf16.mxu0 0
      %307 = vmatpush2.bf16.msra.mxu0 0
      %308 = vmatprep.subr.bf16.mxu0 0
      %309 = vmatpush2.bf16.msra.mxu0 0
      %310 = vmatprep.subr.bf16.mxu0 0
      %311 = vmatpush2.bf16.msra.mxu0 0
      %312 = vmatprep.subr.bf16.mxu0 0
      %313 = vmatpush2.bf16.msra.mxu0 0
      %314 = vmatprep.subr.bf16.mxu0 0
      %315 = vmatpush2.bf16.msra.mxu0 0
      %316 = vmatprep.subr.bf16.mxu0 0
      %317 = vmatpush2.bf16.msra.mxu0 0
      %318 = vmatprep.subr.bf16.mxu0 0
      %319 = vmatpush2.bf16.msra.mxu0 0
      %320 = vmatprep.mubr.bf16.mxu0 0
      %321 = vmatmul.mubr.bf16.gmra.mxu0 %v224
      %v322 = vpop.f32.mrf.mxu0
      %v323 = vadd.f32 0.0, %v322
      %v324 = vpop.f32.mrf.mxu0
      %v325 = vpop.f32.mrf.mxu0
      %v326 = vadd.f32 0.0, %v325
      %v327 = vpop.f32.mrf.mxu0
      %328 = vmatprep.mubr.bf16.mxu0 0
      %329 = vmatmul.mubr.bf16.gmra.mxu0 %v225
      %v330 = vpop.f32.mrf.mxu0
      %v331 = vadd.f32 0.0, %v330
      %v332 = vpop.f32.mrf.mxu0
      %v333 = vpop.f32.mrf.mxu0
      %v334 = vadd.f32 0.0, %v333
      %v335 = vpop.f32.mrf.mxu0
      %336 = vmatprep.mubr.bf16.mxu0 0
      %337 = vmatmul.mubr.bf16.gmra.mxu0 %v226
      %v338 = vpop.f32.mrf.mxu0
      %v339 = vadd.f32 0.0, %v338
      %v340 = vpop.f32.mrf.mxu0
      %v341 = vpop.f32.mrf.mxu0
      %v342 = vadd.f32 0.0, %v341
      %v343 = vpop.f32.mrf.mxu0
      %344 = vmatprep.mubr.bf16.mxu0 0
      %345 = vmatmul.mubr.bf16.gmra.mxu0 %v227
      %v346 = vpop.f32.mrf.mxu0
      %v347 = vadd.f32 0.0, %v346
      %v348 = vpop.f32.mrf.mxu0
      %v349 = vpop.f32.mrf.mxu0
      %v350 = vadd.f32 0.0, %v349
      %v351 = vpop.f32.mrf.mxu0
      %352 = vmatprep.mubr.bf16.mxu0 0
      %353 = vmatmul.mubr.bf16.gmra.mxu0 %v228
      %v354 = vpop.f32.mrf.mxu0
      %v355 = vadd.f32 0.0, %v354
      %v356 = vpop.f32.mrf.mxu0
      %v357 = vpop.f32.mrf.mxu0
      %v358 = vadd.f32 0.0, %v357
      %v359 = vpop.f32.mrf.mxu0
      %360 = vmatprep.mubr.bf16.mxu0 0
      %361 = vmatmul.mubr.bf16.gmra.mxu0 %v229
      %v362 = vpop.f32.mrf.mxu0
      %v363 = vadd.f32 0.0, %v362
      %v364 = vpop.f32.mrf.mxu0
      %v365 = vpop.f32.mrf.mxu0
      %v366 = vadd.f32 0.0, %v365
      %v367 = vpop.f32.mrf.mxu0
      %368 = vmatprep.mubr.bf16.mxu0 0
      %369 = vmatmul.mubr.bf16.gmra.mxu0 %v230
      %v370 = vpop.f32.mrf.mxu0
      %v371 = vadd.f32 0.0, %v370
      %v372 = vpop.f32.mrf.mxu0
      %v373 = vpop.f32.mrf.mxu0
      %v374 = vadd.f32 0.0, %v373
      %v375 = vpop.f32.mrf.mxu0
      %376 = vmatprep.mubr.bf16.mxu0 0
      %377 = vmatmul.mubr.bf16.gmra.mxu0 %v231
      %v378 = vpop.f32.mrf.mxu0
      %v379 = vadd.f32 0.0, %v378
      %v380 = vpop.f32.mrf.mxu0
      %v381 = vpop.f32.mrf.mxu0
      %v382 = vadd.f32 0.0, %v381
      %v383 = vpop.f32.mrf.mxu0
      %384 = vdwg.mxu0
      %v385 = vpack.c.bf16 %v326, %v323
      %v386 = vpack.c.bf16 %v334, %v331
      %v387 = vpack.c.bf16 %v342, %v339
      %v388 = vpack.c.bf16 %v350, %v347
      %v389 = vpack.c.bf16 %v358, %v355
      %v390 = vpack.c.bf16 %v366, %v363
      %v391 = vpack.c.bf16 %v374, %v371
      %v392 = vpack.c.bf16 %v382, %v379
      %v401 = vunpack.c.l.b16 %v385
      %v402 = vunpack.c.h.b16 %v385
      %v403 = vunpack.c.l.b16 %v386
      %v404 = vunpack.c.h.b16 %v386
      %v405 = vunpack.c.l.b16 %v387
      %v406 = vunpack.c.h.b16 %v387
      %v407 = vunpack.c.l.b16 %v388
      %v408 = vunpack.c.h.b16 %v388
      %v409 = vunpack.c.l.b16 %v389
      %v410 = vunpack.c.h.b16 %v389
      %v411 = vunpack.c.l.b16 %v390
      %v412 = vunpack.c.h.b16 %v390
      %v413 = vunpack.c.l.b16 %v391
      %v414 = vunpack.c.h.b16 %v391
      %v415 = vunpack.c.l.b16 %v392
      %v416 = vunpack.c.h.b16 %v392
      %v417 = vpack.c.b16 %v401, %v401
      %v418 = vpack.c.b16 %v402, %v402
      %v419 = vpack.c.b16 %v403, %v403
      %v420 = vpack.c.b16 %v404, %v404
      %v421 = vpack.c.b16 %v405, %v405
      %v422 = vpack.c.b16 %v406, %v406
      %v423 = vpack.c.b16 %v407, %v407
      %v424 = vpack.c.b16 %v408, %v408
      %v425 = vpack.c.b16 %v409, %v409
      %v426 = vpack.c.b16 %v410, %v410
      %v427 = vpack.c.b16 %v411, %v411
      %v428 = vpack.c.b16 %v412, %v412
      %v429 = vpack.c.b16 %v413, %v413
      %v430 = vpack.c.b16 %v414, %v414
      %v431 = vpack.c.b16 %v415, %v415
      %v432 = vpack.c.b16 %v416, %v416
      %449 = vst [vmem:[#allocation4] sm:$0xf] %v417
      %450 = vst [vmem:[#allocation4 + $0x4] sm:$0xf] %v418
      %451 = vst [vmem:[#allocation4 + $0x8] sm:$0xf] %v419
      %452 = vst [vmem:[#allocation4 + $0xc] sm:$0xf] %v420
      %453 = vst [vmem:[#allocation4 + $0x10] sm:$0xf] %v421
      %454 = vst [vmem:[#allocation4 + $0x14] sm:$0xf] %v422
      %455 = vst [vmem:[#allocation4 + $0x18] sm:$0xf] %v423
      %456 = vst [vmem:[#allocation4 + $0x1c] sm:$0xf] %v424
      %457 = vst [vmem:[#allocation4 + $0x20] sm:$0xf] %v425
      %458 = vst [vmem:[#allocation4 + $0x24] sm:$0xf] %v426
      %459 = vst [vmem:[#allocation4 + $0x28] sm:$0xf] %v427
      %460 = vst [vmem:[#allocation4 + $0x2c] sm:$0xf] %v428
      %461 = vst [vmem:[#allocation4 + $0x30] sm:$0xf] %v429
      %462 = vst [vmem:[#allocation4 + $0x34] sm:$0xf] %v430
      %463 = vst [vmem:[#allocation4 + $0x38] sm:$0xf] %v431
      %464 = vst [vmem:[#allocation4 + $0x3c] sm:$0xf] %v432
    $region69: #{tpu_custom_call.1} parent=1 // pred_fallthru
      _
    %v465 = vld [vmem:[#allocation4] sm:$0xf]
    %v466 = vld [vmem:[#allocation4 + $0x4] sm:$0xf]
    %v467 = vld [vmem:[#allocation4 + $0x8] sm:$0xf]
    %v468 = vld [vmem:[#allocation4 + $0xc] sm:$0xf]
    %v469 = vld [vmem:[#allocation4 + $0x10] sm:$0xf]
    %v470 = vld [vmem:[#allocation4 + $0x14] sm:$0xf]
    %v471 = vld [vmem:[#allocation4 + $0x18] sm:$0xf]
    %v472 = vld [vmem:[#allocation4 + $0x1c] sm:$0xf]
    %v473 = vld [vmem:[#allocation4 + $0x20] sm:$0xf]
    %v474 = vld [vmem:[#allocation4 + $0x24] sm:$0xf]
    %v475 = vld [vmem:[#allocation4 + $0x28] sm:$0xf]
    %v476 = vld [vmem:[#allocation4 + $0x2c] sm:$0xf]
    %v477 = vld [vmem:[#allocation4 + $0x30] sm:$0xf]
    %v478 = vld [vmem:[#allocation4 + $0x34] sm:$0xf]
    %v479 = vld [vmem:[#allocation4 + $0x38] sm:$0xf]
    %v480 = vld [vmem:[#allocation4 + $0x3c] sm:$0xf]
    %v481 = vld [vmem:[%s3] sm:$0x1]
    %v483 = vlaneseq
    %v484 = vshrl.u32 %v483, 7
    %v485 = vsub.s32 0, %v484
    %v486 = vrot.slane %v481, %v485
    %v504 = vunpack.c.l.b16 %v120
    %v505 = vunpack.c.l.b16 %v121
    %v506 = vunpack.c.l.b16 %v122
    %v507 = vunpack.c.l.b16 %v123
    %v508 = vunpack.c.l.b16 %v124
    %v509 = vunpack.c.l.b16 %v125
    %v510 = vunpack.c.l.b16 %v126
    %v511 = vunpack.c.l.b16 %v127
    %v512 = vunpack.c.l.b16 %v128
    %v513 = vunpack.c.l.b16 %v129
    %v514 = vunpack.c.l.b16 %v130
    %v515 = vunpack.c.l.b16 %v131
    %v516 = vunpack.c.l.b16 %v132
    %v517 = vunpack.c.l.b16 %v133
    %v518 = vunpack.c.l.b16 %v134
    %v519 = vunpack.c.l.b16 %v135
    %v520 = vpack.c.b16 %v505, %v504
    %v521 = vpack.c.b16 %v507, %v506
    %v522 = vpack.c.b16 %v509, %v508
    %v523 = vpack.c.b16 %v511, %v510
    %v524 = vpack.c.b16 %v513, %v512
    %v525 = vpack.c.b16 %v515, %v514
    %v526 = vpack.c.b16 %v517, %v516
    %v527 = vpack.c.b16 %v519, %v518
    %v552 = vunpack.c.l.b16 %v465
    %v553 = vunpack.c.l.b16 %v466
    %v554 = vunpack.c.l.b16 %v467
    %v555 = vunpack.c.l.b16 %v468
    %v556 = vunpack.c.l.b16 %v469
    %v557 = vunpack.c.l.b16 %v470
    %v558 = vunpack.c.l.b16 %v471
    %v559 = vunpack.c.l.b16 %v472
    %v560 = vunpack.c.l.b16 %v473
    %v561 = vunpack.c.l.b16 %v474
    %v562 = vunpack.c.l.b16 %v475
    %v563 = vunpack.c.l.b16 %v476
    %v564 = vunpack.c.l.b16 %v477
    %v565 = vunpack.c.l.b16 %v478
    %v566 = vunpack.c.l.b16 %v479
    %v567 = vunpack.c.l.b16 %v480
    %v568 = vpack.c.b16 %v553, %v552
    %v569 = vpack.c.b16 %v555, %v554
    %v570 = vpack.c.b16 %v557, %v556
    %v571 = vpack.c.b16 %v559, %v558
    %v572 = vpack.c.b16 %v561, %v560
    %v573 = vpack.c.b16 %v563, %v562
    %v574 = vpack.c.b16 %v565, %v564
    %v575 = vpack.c.b16 %v567, %v566
    %584 = vmatprep.subr.bf16.mxu0 0
    %585 = vmatpush1.bf16.msra.mxu0 %v575
    %586 = vmatprep.subr.bf16.mxu0 0
    %587 = vmatpush1.bf16.msra.mxu0 %v574
    %588 = vmatprep.subr.bf16.mxu0 0
    %589 = vmatpush1.bf16.msra.mxu0 %v573
    %590 = vmatprep.subr.bf16.mxu0 0
    %591 = vmatpush1.bf16.msra.mxu0 %v572
    %592 = vmatprep.subr.bf16.mxu0 0
    %593 = vmatpush1.bf16.msra.mxu0 %v571
    %594 = vmatprep.subr.bf16.mxu0 0
    %595 = vmatpush1.bf16.msra.mxu0 %v570
    %596 = vmatprep.subr.bf16.mxu0 0
    %597 = vmatpush1.bf16.msra.mxu0 %v569
    %598 = vmatprep.subr.bf16.mxu0 0
    %599 = vmatpush1.bf16.msra.mxu0 %v568
    %600 = vmatprep.subr.bf16.mxu0 0
    %601 = vmatpush2.bf16.msra.mxu0 0
    %602 = vmatprep.subr.bf16.mxu0 0
    %603 = vmatpush2.bf16.msra.mxu0 0
    %604 = vmatprep.subr.bf16.mxu0 0
    %605 = vmatpush2.bf16.msra.mxu0 0
    %606 = vmatprep.subr.bf16.mxu0 0
    %607 = vmatpush2.bf16.msra.mxu0 0
    %608 = vmatprep.subr.bf16.mxu0 0
    %609 = vmatpush2.bf16.msra.mxu0 0
    %610 = vmatprep.subr.bf16.mxu0 0
    %611 = vmatpush2.bf16.msra.mxu0 0
    %612 = vmatprep.subr.bf16.mxu0 0
    %613 = vmatpush2.bf16.msra.mxu0 0
    %614 = vmatprep.subr.bf16.mxu0 0
    %615 = vmatpush2.bf16.msra.mxu0 0
    %616 = vmatprep.mubr.bf16.mxu0 0
    %617 = vmatmul.mubr.bf16.gmra.mxu0 %v520
    %v618 = vpop.f32.mrf.mxu0
    %v619 = vadd.f32 %v486, %v618
    %v620 = vpop.f32.mrf.mxu0
    %v621 = vpop.f32.mrf.mxu0
    %v622 = vadd.f32 %v486, %v621
    %v623 = vpop.f32.mrf.mxu0
    %624 = vmatprep.mubr.bf16.mxu0 0
    %625 = vmatmul.mubr.bf16.gmra.mxu0 %v521
    %v626 = vpop.f32.mrf.mxu0
    %v627 = vadd.f32 %v486, %v626
    %v628 = vpop.f32.mrf.mxu0
    %v629 = vpop.f32.mrf.mxu0
    %v630 = vadd.f32 %v486, %v629
    %v631 = vpop.f32.mrf.mxu0
    %632 = vmatprep.mubr.bf16.mxu0 0
    %633 = vmatmul.mubr.bf16.gmra.mxu0 %v522
    %v634 = vpop.f32.mrf.mxu0
    %v635 = vadd.f32 %v486, %v634
    %v636 = vpop.f32.mrf.mxu0
    %v637 = vpop.f32.mrf.mxu0
    %v638 = vadd.f32 %v486, %v637
    %v639 = vpop.f32.mrf.mxu0
    %640 = vmatprep.mubr.bf16.mxu0 0
    %641 = vmatmul.mubr.bf16.gmra.mxu0 %v523
    %v642 = vpop.f32.mrf.mxu0
    %v643 = vadd.f32 %v486, %v642
    %v644 = vpop.f32.mrf.mxu0
    %v645 = vpop.f32.mrf.mxu0
    %v646 = vadd.f32 %v486, %v645
    %v647 = vpop.f32.mrf.mxu0
    %648 = vmatprep.mubr.bf16.mxu0 0
    %649 = vmatmul.mubr.bf16.gmra.mxu0 %v524
    %v650 = vpop.f32.mrf.mxu0
    %v651 = vadd.f32 %v486, %v650
    %v652 = vpop.f32.mrf.mxu0
    %v653 = vpop.f32.mrf.mxu0
    %v654 = vadd.f32 %v486, %v653
    %v655 = vpop.f32.mrf.mxu0
    %656 = vmatprep.mubr.bf16.mxu0 0
    %657 = vmatmul.mubr.bf16.gmra.mxu0 %v525
    %v658 = vpop.f32.mrf.mxu0
    %v659 = vadd.f32 %v486, %v658
    %v660 = vpop.f32.mrf.mxu0
    %v661 = vpop.f32.mrf.mxu0
    %v662 = vadd.f32 %v486, %v661
    %v663 = vpop.f32.mrf.mxu0
    %664 = vmatprep.mubr.bf16.mxu0 0
    %665 = vmatmul.mubr.bf16.gmra.mxu0 %v526
    %v666 = vpop.f32.mrf.mxu0
    %v667 = vadd.f32 %v486, %v666
    %v668 = vpop.f32.mrf.mxu0
    %v669 = vpop.f32.mrf.mxu0
    %v670 = vadd.f32 %v486, %v669
    %v671 = vpop.f32.mrf.mxu0
    %672 = vmatprep.mubr.bf16.mxu0 0
    %673 = vmatmul.mubr.bf16.gmra.mxu0 %v527
    %v674 = vpop.f32.mrf.mxu0
    %v675 = vadd.f32 %v486, %v674
    %v676 = vpop.f32.mrf.mxu0
    %v677 = vpop.f32.mrf.mxu0
    %v678 = vadd.f32 %v486, %v677
    %v679 = vpop.f32.mrf.mxu0
    %680 = vdwg.mxu0
    %v681 = vtanh.pop %v619
    %v682 = vtanh.pop %v622
    %v683 = vtanh.pop %v627
    %v684 = vtanh.pop %v630
    %v685 = vtanh.pop %v635
    %v686 = vtanh.pop %v638
    %v687 = vtanh.pop %v643
    %v688 = vtanh.pop %v646
    %v689 = vtanh.pop %v651
    %v690 = vtanh.pop %v654
    %v691 = vtanh.pop %v659
    %v692 = vtanh.pop %v662
    %v693 = vtanh.pop %v667
    %v694 = vtanh.pop %v670
    %v695 = vtanh.pop %v675
    %v696 = vtanh.pop %v678
    %v697 = vpack.c.bf16 %v682, %v681
    %v698 = vpack.c.bf16 %v684, %v683
    %v699 = vpack.c.bf16 %v686, %v685
    %v700 = vpack.c.bf16 %v688, %v687
    %v701 = vpack.c.bf16 %v690, %v689
    %v702 = vpack.c.bf16 %v692, %v691
    %v703 = vpack.c.bf16 %v694, %v693
    %v704 = vpack.c.bf16 %v696, %v695
    %v713 = vunpack.c.l.b16 %v697
    %v714 = vunpack.c.h.b16 %v697
    %v715 = vunpack.c.l.b16 %v698
    %v716 = vunpack.c.h.b16 %v698
    %v717 = vunpack.c.l.b16 %v699
    %v718 = vunpack.c.h.b16 %v699
    %v719 = vunpack.c.l.b16 %v700
    %v720 = vunpack.c.h.b16 %v700
    %v721 = vunpack.c.l.b16 %v701
    %v722 = vunpack.c.h.b16 %v701
    %v723 = vunpack.c.l.b16 %v702
    %v724 = vunpack.c.h.b16 %v702
    %v725 = vunpack.c.l.b16 %v703
    %v726 = vunpack.c.h.b16 %v703
    %v727 = vunpack.c.l.b16 %v704
    %v728 = vunpack.c.h.b16 %v704
    %v729 = vpack.c.b16 %v713, %v713
    %v730 = vpack.c.b16 %v714, %v714
    %v731 = vpack.c.b16 %v715, %v715
    %v732 = vpack.c.b16 %v716, %v716
    %v733 = vpack.c.b16 %v717, %v717
    %v734 = vpack.c.b16 %v718, %v718
    %v735 = vpack.c.b16 %v719, %v719
    %v736 = vpack.c.b16 %v720, %v720
    %v737 = vpack.c.b16 %v721, %v721
    %v738 = vpack.c.b16 %v722, %v722
    %v739 = vpack.c.b16 %v723, %v723
    %v740 = vpack.c.b16 %v724, %v724
    %v741 = vpack.c.b16 %v725, %v725
    %v742 = vpack.c.b16 %v726, %v726
    %v743 = vpack.c.b16 %v727, %v727
    %v744 = vpack.c.b16 %v728, %v728
    %s761 = smul.addr %s136, 4
    %s762 = scalar_lea.vmem [#allocation3], %s761
    %763 = vst [vmem:[%s762] sm:$0xf] %v729
    %764 = vst [vmem:[%s762 + $0x4] sm:$0xf] %v730
    %765 = vst [vmem:[%s762 + $0x8] sm:$0xf] %v731
    %766 = vst [vmem:[%s762 + $0xc] sm:$0xf] %v732
    %767 = vst [vmem:[%s762 + $0x10] sm:$0xf] %v733
    %768 = vst [vmem:[%s762 + $0x14] sm:$0xf] %v734
    %769 = vst [vmem:[%s762 + $0x18] sm:$0xf] %v735
    %770 = vst [vmem:[%s762 + $0x1c] sm:$0xf] %v736
    %771 = vst [vmem:[%s762 + $0x20] sm:$0xf] %v737
    %772 = vst [vmem:[%s762 + $0x24] sm:$0xf] %v738
    %773 = vst [vmem:[%s762 + $0x28] sm:$0xf] %v739
    %774 = vst [vmem:[%s762 + $0x2c] sm:$0xf] %v740
    %775 = vst [vmem:[%s762 + $0x30] sm:$0xf] %v741
    %776 = vst [vmem:[%s762 + $0x34] sm:$0xf] %v742
    %777 = vst [vmem:[%s762 + $0x38] sm:$0xf] %v743
    %778 = vst [vmem:[%s762 + $0x3c] sm:$0xf] %v744
    // Predicated region
    $region70: #{tpu_custom_call.1} parent=1 // pred_check
      %p779 = pneg %p156
    $region71: #{tpu_custom_call.1} parent=1 // pred_check_branch
      %781 = sbr.rel (%p779) target = $region73
    $region72: #{tpu_custom_call.1} parent=1 // pred_region
      %v782 = vld [vmem:[#allocation2] sm:$0xf]
      %v783 = vld [vmem:[#allocation2 + $0x4] sm:$0xf]
      %v784 = vld [vmem:[#allocation2 + $0x8] sm:$0xf]
      %v785 = vld [vmem:[#allocation2 + $0xc] sm:$0xf]
      %v786 = vld [vmem:[#allocation2 + $0x10] sm:$0xf]
      %v787 = vld [vmem:[#allocation2 + $0x14] sm:$0xf]
      %v788 = vld [vmem:[#allocation2 + $0x18] sm:$0xf]
      %v789 = vld [vmem:[#allocation2 + $0x1c] sm:$0xf]
      %v790 = vld [vmem:[#allocation2 + $0x20] sm:$0xf]
      %v791 = vld [vmem:[#allocation2 + $0x24] sm:$0xf]
      %v792 = vld [vmem:[#allocation2 + $0x28] sm:$0xf]
      %v793 = vld [vmem:[#allocation2 + $0x2c] sm:$0xf]
      %v794 = vld [vmem:[#allocation2 + $0x30] sm:$0xf]
      %v795 = vld [vmem:[#allocation2 + $0x34] sm:$0xf]
      %v796 = vld [vmem:[#allocation2 + $0x38] sm:$0xf]
      %v797 = vld [vmem:[#allocation2 + $0x3c] sm:$0xf]
      %v798 = vld [vmem:[#allocation3] sm:$0xf]
      %v799 = vld [vmem:[#allocation3 + $0x4] sm:$0xf]
      %v800 = vld [vmem:[#allocation3 + $0x8] sm:$0xf]
      %v801 = vld [vmem:[#allocation3 + $0xc] sm:$0xf]
      %v802 = vld [vmem:[#allocation3 + $0x10] sm:$0xf]
      %v803 = vld [vmem:[#allocation3 + $0x14] sm:$0xf]
      %v804 = vld [vmem:[#allocation3 + $0x18] sm:$0xf]
      %v805 = vld [vmem:[#allocation3 + $0x1c] sm:$0xf]
      %v806 = vld [vmem:[#allocation3 + $0x20] sm:$0xf]
      %v807 = vld [vmem:[#allocation3 + $0x24] sm:$0xf]
      %v808 = vld [vmem:[#allocation3 + $0x28] sm:$0xf]
      %v809 = vld [vmem:[#allocation3 + $0x2c] sm:$0xf]
      %v810 = vld [vmem:[#allocation3 + $0x30] sm:$0xf]
      %v811 = vld [vmem:[#allocation3 + $0x34] sm:$0xf]
      %v812 = vld [vmem:[#allocation3 + $0x38] sm:$0xf]
      %v813 = vld [vmem:[#allocation3 + $0x3c] sm:$0xf]
      %v814 = vld [vmem:[#allocation11] sm:$0xf]
      %v815 = vld [vmem:[#allocation11 + $0x4] sm:$0xf]
      %v816 = vld [vmem:[#allocation11 + $0x8] sm:$0xf]
      %v817 = vld [vmem:[#allocation11 + $0xc] sm:$0xf]
      %v818 = vld [vmem:[#allocation11 + $0x10] sm:$0xf]
      %v819 = vld [vmem:[#allocation11 + $0x14] sm:$0xf]
      %v820 = vld [vmem:[#allocation11 + $0x18] sm:$0xf]
      %v821 = vld [vmem:[#allocation11 + $0x1c] sm:$0xf]
      %v822 = vld [vmem:[#allocation11 + $0x20] sm:$0xf]
      %v823 = vld [vmem:[#allocation11 + $0x24] sm:$0xf]
      %v824 = vld [vmem:[#allocation11 + $0x28] sm:$0xf]
      %v825 = vld [vmem:[#allocation11 + $0x2c] sm:$0xf]
      %v826 = vld [vmem:[#allocation11 + $0x30] sm:$0xf]
      %v827 = vld [vmem:[#allocation11 + $0x34] sm:$0xf]
      %v828 = vld [vmem:[#allocation11 + $0x38] sm:$0xf]
      %v829 = vld [vmem:[#allocation11 + $0x3c] sm:$0xf]
      %v846 = vunpack.c.l.b16 %v798
      %v847 = vunpack.c.l.b16 %v799
      %v848 = vunpack.c.l.b16 %v800
      %v849 = vunpack.c.l.b16 %v801
      %v850 = vunpack.c.l.b16 %v802
      %v851 = vunpack.c.l.b16 %v803
      %v852 = vunpack.c.l.b16 %v804
      %v853 = vunpack.c.l.b16 %v805
      %v854 = vunpack.c.l.b16 %v806
      %v855 = vunpack.c.l.b16 %v807
      %v856 = vunpack.c.l.b16 %v808
      %v857 = vunpack.c.l.b16 %v809
      %v858 = vunpack.c.l.b16 %v810
      %v859 = vunpack.c.l.b16 %v811
      %v860 = vunpack.c.l.b16 %v812
      %v861 = vunpack.c.l.b16 %v813
      %v862 = vpack.c.b16 %v847, %v846
      %v863 = vpack.c.b16 %v849, %v848
      %v864 = vpack.c.b16 %v851, %v850
      %v865 = vpack.c.b16 %v853, %v852
      %v866 = vpack.c.b16 %v855, %v854
      %v867 = vpack.c.b16 %v857, %v856
      %v868 = vpack.c.b16 %v859, %v858
      %v869 = vpack.c.b16 %v861, %v860
      %v894 = vunpack.c.l.b16 %v814
      %v895 = vunpack.c.l.b16 %v815
      %v896 = vunpack.c.l.b16 %v816
      %v897 = vunpack.c.l.b16 %v817
      %v898 = vunpack.c.l.b16 %v818
      %v899 = vunpack.c.l.b16 %v819
      %v900 = vunpack.c.l.b16 %v820
      %v901 = vunpack.c.l.b16 %v821
      %v902 = vunpack.c.l.b16 %v822
      %v903 = vunpack.c.l.b16 %v823
      %v904 = vunpack.c.l.b16 %v824
      %v905 = vunpack.c.l.b16 %v825
      %v906 = vunpack.c.l.b16 %v826
      %v907 = vunpack.c.l.b16 %v827
      %v908 = vunpack.c.l.b16 %v828
      %v909 = vunpack.c.l.b16 %v829
      %v910 = vpack.c.b16 %v895, %v894
      %v911 = vpack.c.b16 %v897, %v896
      %v912 = vpack.c.b16 %v899, %v898
      %v913 = vpack.c.b16 %v901, %v900
      %v914 = vpack.c.b16 %v903, %v902
      %v915 = vpack.c.b16 %v905, %v904
      %v916 = vpack.c.b16 %v907, %v906
      %v917 = vpack.c.b16 %v909, %v908
      %926 = vmatprep.subr.bf16.mxu0 0
      %927 = vmatpush1.bf16.msra.mxu0 %v917
      %928 = vmatprep.subr.bf16.mxu0 0
      %929 = vmatpush1.bf16.msra.mxu0 %v916
      %930 = vmatprep.subr.bf16.mxu0 0
      %931 = vmatpush1.bf16.msra.mxu0 %v915
      %932 = vmatprep.subr.bf16.mxu0 0
      %933 = vmatpush1.bf16.msra.mxu0 %v914
      %934 = vmatprep.subr.bf16.mxu0 0
      %935 = vmatpush1.bf16.msra.mxu0 %v913
      %936 = vmatprep.subr.bf16.mxu0 0
      %937 = vmatpush1.bf16.msra.mxu0 %v912
      %938 = vmatprep.subr.bf16.mxu0 0
      %939 = vmatpush1.bf16.msra.mxu0 %v911
      %940 = vmatprep.subr.bf16.mxu0 0
      %941 = vmatpush1.bf16.msra.mxu0 %v910
      %942 = vmatprep.subr.bf16.mxu0 0
      %943 = vmatpush2.bf16.msra.mxu0 0
      %944 = vmatprep.subr.bf16.mxu0 0
      %945 = vmatpush2.bf16.msra.mxu0 0
      %946 = vmatprep.subr.bf16.mxu0 0
      %947 = vmatpush2.bf16.msra.mxu0 0
      %948 = vmatprep.subr.bf16.mxu0 0
      %949 = vmatpush2.bf16.msra.mxu0 0
      %950 = vmatprep.subr.bf16.mxu0 0
      %951 = vmatpush2.bf16.msra.mxu0 0
      %952 = vmatprep.subr.bf16.mxu0 0
      %953 = vmatpush2.bf16.msra.mxu0 0
      %954 = vmatprep.subr.bf16.mxu0 0
      %955 = vmatpush2.bf16.msra.mxu0 0
      %956 = vmatprep.subr.bf16.mxu0 0
      %957 = vmatpush2.bf16.msra.mxu0 0
      %958 = vmatprep.mubr.bf16.mxu0 0
      %959 = vmatmul.mubr.bf16.gmra.mxu0 %v862
      %v960 = vpop.f32.mrf.mxu0
      %v961 = vadd.f32 0.0, %v960
      %v962 = vpop.f32.mrf.mxu0
      %v963 = vpop.f32.mrf.mxu0
      %v964 = vadd.f32 0.0, %v963
      %v965 = vpop.f32.mrf.mxu0
      %966 = vmatprep.mubr.bf16.mxu0 0
      %967 = vmatmul.mubr.bf16.gmra.mxu0 %v863
      %v968 = vpop.f32.mrf.mxu0
      %v969 = vadd.f32 0.0, %v968
      %v970 = vpop.f32.mrf.mxu0
      %v971 = vpop.f32.mrf.mxu0
      %v972 = vadd.f32 0.0, %v971
      %v973 = vpop.f32.mrf.mxu0
      %974 = vmatprep.mubr.bf16.mxu0 0
      %975 = vmatmul.mubr.bf16.gmra.mxu0 %v864
      %v976 = vpop.f32.mrf.mxu0
      %v977 = vadd.f32 0.0, %v976
      %v978 = vpop.f32.mrf.mxu0
      %v979 = vpop.f32.mrf.mxu0
      %v980 = vadd.f32 0.0, %v979
      %v981 = vpop.f32.mrf.mxu0
      %982 = vmatprep.mubr.bf16.mxu0 0
      %983 = vmatmul.mubr.bf16.gmra.mxu0 %v865
      %v984 = vpop.f32.mrf.mxu0
      %v985 = vadd.f32 0.0, %v984
      %v986 = vpop.f32.mrf.mxu0
      %v987 = vpop.f32.mrf.mxu0
      %v988 = vadd.f32 0.0, %v987
      %v989 = vpop.f32.mrf.mxu0
      %990 = vmatprep.mubr.bf16.mxu0 0
      %991 = vmatmul.mubr.bf16.gmra.mxu0 %v866
      %v992 = vpop.f32.mrf.mxu0
      %v993 = vadd.f32 0.0, %v992
      %v994 = vpop.f32.mrf.mxu0
      %v995 = vpop.f32.mrf.mxu0
      %v996 = vadd.f32 0.0, %v995
      %v997 = vpop.f32.mrf.mxu0
      %998 = vmatprep.mubr.bf16.mxu0 0
      %999 = vmatmul.mubr.bf16.gmra.mxu0 %v867
      %v1000 = vpop.f32.mrf.mxu0
      %v1001 = vadd.f32 0.0, %v1000
      %v1002 = vpop.f32.mrf.mxu0
      %v1003 = vpop.f32.mrf.mxu0
      %v1004 = vadd.f32 0.0, %v1003
      %v1005 = vpop.f32.mrf.mxu0
      %1006 = vmatprep.mubr.bf16.mxu0 0
      %1007 = vmatmul.mubr.bf16.gmra.mxu0 %v868
      %v1008 = vpop.f32.mrf.mxu0
      %v1009 = vadd.f32 0.0, %v1008
      %v1010 = vpop.f32.mrf.mxu0
      %v1011 = vpop.f32.mrf.mxu0
      %v1012 = vadd.f32 0.0, %v1011
      %v1013 = vpop.f32.mrf.mxu0
      %1014 = vmatprep.mubr.bf16.mxu0 0
      %1015 = vmatmul.mubr.bf16.gmra.mxu0 %v869
      %v1016 = vpop.f32.mrf.mxu0
      %v1017 = vadd.f32 0.0, %v1016
      %v1018 = vpop.f32.mrf.mxu0
      %v1019 = vpop.f32.mrf.mxu0
      %v1020 = vadd.f32 0.0, %v1019
      %v1021 = vpop.f32.mrf.mxu0
      %1022 = vdwg.mxu0
      %v1023 = vpack.c.bf16 %v964, %v961
      %v1024 = vpack.c.bf16 %v972, %v969
      %v1025 = vpack.c.bf16 %v980, %v977
      %v1026 = vpack.c.bf16 %v988, %v985
      %v1027 = vpack.c.bf16 %v996, %v993
      %v1028 = vpack.c.bf16 %v1004, %v1001
      %v1029 = vpack.c.bf16 %v1012, %v1009
      %v1030 = vpack.c.bf16 %v1020, %v1017
      %v1031 = vld [vmem:[%s5] sm:$0x1]
      %v1033 = vlaneseq
      %v1034 = vshrl.u32 %v1033, 7
      %v1035 = vsub.s32 0, %v1034
      %v1036 = vrot.slane %v1031, %v1035
      %v1054 = vunpack.c.l.b16 %v782
      %v1055 = vunpack.c.l.b16 %v783
      %v1056 = vunpack.c.l.b16 %v784
      %v1057 = vunpack.c.l.b16 %v785
      %v1058 = vunpack.c.l.b16 %v786
      %v1059 = vunpack.c.l.b16 %v787
      %v1060 = vunpack.c.l.b16 %v788
      %v1061 = vunpack.c.l.b16 %v789
      %v1062 = vunpack.c.l.b16 %v790
      %v1063 = vunpack.c.l.b16 %v791
      %v1064 = vunpack.c.l.b16 %v792
      %v1065 = vunpack.c.l.b16 %v793
      %v1066 = vunpack.c.l.b16 %v794
      %v1067 = vunpack.c.l.b16 %v795
      %v1068 = vunpack.c.l.b16 %v796
      %v1069 = vunpack.c.l.b16 %v797
      %v1070 = vpack.c.b16 %v1055, %v1054
      %v1071 = vpack.c.b16 %v1057, %v1056
      %v1072 = vpack.c.b16 %v1059, %v1058
      %v1073 = vpack.c.b16 %v1061, %v1060
      %v1074 = vpack.c.b16 %v1063, %v1062
      %v1075 = vpack.c.b16 %v1065, %v1064
      %v1076 = vpack.c.b16 %v1067, %v1066
      %v1077 = vpack.c.b16 %v1069, %v1068
      %1086 = vmatprep.subr.bf16.mxu0 0
      %1087 = vmatpush1.bf16.msra.mxu0 %v1030
      %1088 = vmatprep.subr.bf16.mxu0 0
      %1089 = vmatpush1.bf16.msra.mxu0 %v1029
      %1090 = vmatprep.subr.bf16.mxu0 0
      %1091 = vmatpush1.bf16.msra.mxu0 %v1028
      %1092 = vmatprep.subr.bf16.mxu0 0
      %1093 = vmatpush1.bf16.msra.mxu0 %v1027
      %1094 = vmatprep.subr.bf16.mxu0 0
      %1095 = vmatpush1.bf16.msra.mxu0 %v1026
      %1096 = vmatprep.subr.bf16.mxu0 0
      %1097 = vmatpush1.bf16.msra.mxu0 %v1025
      %1098 = vmatprep.subr.bf16.mxu0 0
      %1099 = vmatpush1.bf16.msra.mxu0 %v1024
      %1100 = vmatprep.subr.bf16.mxu0 0
      %1101 = vmatpush1.bf16.msra.mxu0 %v1023
      %1102 = vmatprep.subr.bf16.mxu0 0
      %1103 = vmatpush2.bf16.msra.mxu0 0
      %1104 = vmatprep.subr.bf16.mxu0 0
      %1105 = vmatpush2.bf16.msra.mxu0 0
      %1106 = vmatprep.subr.bf16.mxu0 0
      %1107 = vmatpush2.bf16.msra.mxu0 0
      %1108 = vmatprep.subr.bf16.mxu0 0
      %1109 = vmatpush2.bf16.msra.mxu0 0
      %1110 = vmatprep.subr.bf16.mxu0 0
      %1111 = vmatpush2.bf16.msra.mxu0 0
      %1112 = vmatprep.subr.bf16.mxu0 0
      %1113 = vmatpush2.bf16.msra.mxu0 0
      %1114 = vmatprep.subr.bf16.mxu0 0
      %1115 = vmatpush2.bf16.msra.mxu0 0
      %1116 = vmatprep.subr.bf16.mxu0 0
      %1117 = vmatpush2.bf16.msra.mxu0 0
      %1118 = vmatprep.mubr.bf16.mxu0 0
      %1119 = vmatmul.mubr.bf16.gmra.mxu0 %v1070
      %v1120 = vpop.f32.mrf.mxu0
      %v1121 = vadd.f32 %v1036, %v1120
      %v1122 = vpop.f32.mrf.mxu0
      %v1123 = vpop.f32.mrf.mxu0
      %v1124 = vadd.f32 %v1036, %v1123
      %v1125 = vpop.f32.mrf.mxu0
      %1126 = vmatprep.mubr.bf16.mxu0 0
      %1127 = vmatmul.mubr.bf16.gmra.mxu0 %v1071
      %v1128 = vpop.f32.mrf.mxu0
      %v1129 = vadd.f32 %v1036, %v1128
      %v1130 = vpop.f32.mrf.mxu0
      %v1131 = vpop.f32.mrf.mxu0
      %v1132 = vadd.f32 %v1036, %v1131
      %v1133 = vpop.f32.mrf.mxu0
      %1134 = vmatprep.mubr.bf16.mxu0 0
      %1135 = vmatmul.mubr.bf16.gmra.mxu0 %v1072
      %v1136 = vpop.f32.mrf.mxu0
      %v1137 = vadd.f32 %v1036, %v1136
      %v1138 = vpop.f32.mrf.mxu0
      %v1139 = vpop.f32.mrf.mxu0
      %v1140 = vadd.f32 %v1036, %v1139
      %v1141 = vpop.f32.mrf.mxu0
      %1142 = vmatprep.mubr.bf16.mxu0 0
      %1143 = vmatmul.mubr.bf16.gmra.mxu0 %v1073
      %v1144 = vpop.f32.mrf.mxu0
      %v1145 = vadd.f32 %v1036, %v1144
      %v1146 = vpop.f32.mrf.mxu0
      %v1147 = vpop.f32.mrf.mxu0
      %v1148 = vadd.f32 %v1036, %v1147
      %v1149 = vpop.f32.mrf.mxu0
      %1150 = vmatprep.mubr.bf16.mxu0 0
      %1151 = vmatmul.mubr.bf16.gmra.mxu0 %v1074
      %v1152 = vpop.f32.mrf.mxu0
      %v1153 = vadd.f32 %v1036, %v1152
      %v1154 = vpop.f32.mrf.mxu0
      %v1155 = vpop.f32.mrf.mxu0
      %v1156 = vadd.f32 %v1036, %v1155
      %v1157 = vpop.f32.mrf.mxu0
      %1158 = vmatprep.mubr.bf16.mxu0 0
      %1159 = vmatmul.mubr.bf16.gmra.mxu0 %v1075
      %v1160 = vpop.f32.mrf.mxu0
      %v1161 = vadd.f32 %v1036, %v1160
      %v1162 = vpop.f32.mrf.mxu0
      %v1163 = vpop.f32.mrf.mxu0
      %v1164 = vadd.f32 %v1036, %v1163
      %v1165 = vpop.f32.mrf.mxu0
      %1166 = vmatprep.mubr.bf16.mxu0 0
      %1167 = vmatmul.mubr.bf16.gmra.mxu0 %v1076
      %v1168 = vpop.f32.mrf.mxu0
      %v1169 = vadd.f32 %v1036, %v1168
      %v1170 = vpop.f32.mrf.mxu0
      %v1171 = vpop.f32.mrf.mxu0
      %v1172 = vadd.f32 %v1036, %v1171
      %v1173 = vpop.f32.mrf.mxu0
      %1174 = vmatprep.mubr.bf16.mxu0 0
      %1175 = vmatmul.mubr.bf16.gmra.mxu0 %v1077
      %v1176 = vpop.f32.mrf.mxu0
      %v1177 = vadd.f32 %v1036, %v1176
      %v1178 = vpop.f32.mrf.mxu0
      %v1179 = vpop.f32.mrf.mxu0
      %v1180 = vadd.f32 %v1036, %v1179
      %v1181 = vpop.f32.mrf.mxu0
      %1182 = vdwg.mxu0
      %v1183 = vmax.f32 %v1121, 0.0
      %v1184 = vmax.f32 %v1124, 0.0
      %v1185 = vmax.f32 %v1129, 0.0
      %v1186 = vmax.f32 %v1132, 0.0
      %v1187 = vmax.f32 %v1137, 0.0
      %v1188 = vmax.f32 %v1140, 0.0
      %v1189 = vmax.f32 %v1145, 0.0
      %v1190 = vmax.f32 %v1148, 0.0
      %v1191 = vmax.f32 %v1153, 0.0
      %v1192 = vmax.f32 %v1156, 0.0
      %v1193 = vmax.f32 %v1161, 0.0
      %v1194 = vmax.f32 %v1164, 0.0
      %v1195 = vmax.f32 %v1169, 0.0
      %v1196 = vmax.f32 %v1172, 0.0
      %v1197 = vmax.f32 %v1177, 0.0
      %v1198 = vmax.f32 %v1180, 0.0
      %v1199 = vpack.c.bf16 %v1184, %v1183
      %v1200 = vpack.c.bf16 %v1186, %v1185
      %v1201 = vpack.c.bf16 %v1188, %v1187
      %v1202 = vpack.c.bf16 %v1190, %v1189
      %v1203 = vpack.c.bf16 %v1192, %v1191
      %v1204 = vpack.c.bf16 %v1194, %v1193
      %v1205 = vpack.c.bf16 %v1196, %v1195
      %v1206 = vpack.c.bf16 %v1198, %v1197
      %v1207 = vld [vmem:[#allocation13] sm:$0xf]
      %v1208 = vld [vmem:[#allocation13 + $0x4] sm:$0xf]
      %v1209 = vld [vmem:[#allocation13 + $0x8] sm:$0xf]
      %v1210 = vld [vmem:[#allocation13 + $0xc] sm:$0xf]
      %v1211 = vld [vmem:[#allocation13 + $0x10] sm:$0xf]
      %v1212 = vld [vmem:[#allocation13 + $0x14] sm:$0xf]
      %v1213 = vld [vmem:[#allocation13 + $0x18] sm:$0xf]
      %v1214 = vld [vmem:[#allocation13 + $0x1c] sm:$0xf]
      %v1215 = vld [vmem:[#allocation13 + $0x20] sm:$0xf]
      %v1216 = vld [vmem:[#allocation13 + $0x24] sm:$0xf]
      %v1217 = vld [vmem:[#allocation13 + $0x28] sm:$0xf]
      %v1218 = vld [vmem:[#allocation13 + $0x2c] sm:$0xf]
      %v1219 = vld [vmem:[#allocation13 + $0x30] sm:$0xf]
      %v1220 = vld [vmem:[#allocation13 + $0x34] sm:$0xf]
      %v1221 = vld [vmem:[#allocation13 + $0x38] sm:$0xf]
      %v1222 = vld [vmem:[#allocation13 + $0x3c] sm:$0xf]
      %v1239 = vunpack.c.l.b16 %v1207
      %v1240 = vunpack.c.l.b16 %v1208
      %v1241 = vunpack.c.l.b16 %v1209
      %v1242 = vunpack.c.l.b16 %v1210
      %v1243 = vunpack.c.l.b16 %v1211
      %v1244 = vunpack.c.l.b16 %v1212
      %v1245 = vunpack.c.l.b16 %v1213
      %v1246 = vunpack.c.l.b16 %v1214
      %v1247 = vunpack.c.l.b16 %v1215
      %v1248 = vunpack.c.l.b16 %v1216
      %v1249 = vunpack.c.l.b16 %v1217
      %v1250 = vunpack.c.l.b16 %v1218
      %v1251 = vunpack.c.l.b16 %v1219
      %v1252 = vunpack.c.l.b16 %v1220
      %v1253 = vunpack.c.l.b16 %v1221
      %v1254 = vunpack.c.l.b16 %v1222
      %v1255 = vpack.c.b16 %v1240, %v1239
      %v1256 = vpack.c.b16 %v1242, %v1241
      %v1257 = vpack.c.b16 %v1244, %v1243
      %v1258 = vpack.c.b16 %v1246, %v1245
      %v1259 = vpack.c.b16 %v1248, %v1247
      %v1260 = vpack.c.b16 %v1250, %v1249
      %v1261 = vpack.c.b16 %v1252, %v1251
      %v1262 = vpack.c.b16 %v1254, %v1253
      %1271 = vmatprep.subr.bf16.mxu0 0
      %1272 = vmatpush1.bf16.msra.mxu0 %v1262
      %1273 = vmatprep.subr.bf16.mxu0 0
      %1274 = vmatpush1.bf16.msra.mxu0 %v1261
      %1275 = vmatprep.subr.bf16.mxu0 0
      %1276 = vmatpush1.bf16.msra.mxu0 %v1260
      %1277 = vmatprep.subr.bf16.mxu0 0
      %1278 = vmatpush1.bf16.msra.mxu0 %v1259
      %1279 = vmatprep.subr.bf16.mxu0 0
      %1280 = vmatpush1.bf16.msra.mxu0 %v1258
      %1281 = vmatprep.subr.bf16.mxu0 0
      %1282 = vmatpush1.bf16.msra.mxu0 %v1257
      %1283 = vmatprep.subr.bf16.mxu0 0
      %1284 = vmatpush1.bf16.msra.mxu0 %v1256
      %1285 = vmatprep.subr.bf16.mxu0 0
      %1286 = vmatpush1.bf16.msra.mxu0 %v1255
      %1287 = vmatprep.subr.bf16.mxu0 0
      %1288 = vmatpush2.bf16.msra.mxu0 0
      %1289 = vmatprep.subr.bf16.mxu0 0
      %1290 = vmatpush2.bf16.msra.mxu0 0
      %1291 = vmatprep.subr.bf16.mxu0 0
      %1292 = vmatpush2.bf16.msra.mxu0 0
      %1293 = vmatprep.subr.bf16.mxu0 0
      %1294 = vmatpush2.bf16.msra.mxu0 0
      %1295 = vmatprep.subr.bf16.mxu0 0
      %1296 = vmatpush2.bf16.msra.mxu0 0
      %1297 = vmatprep.subr.bf16.mxu0 0
      %1298 = vmatpush2.bf16.msra.mxu0 0
      %1299 = vmatprep.subr.bf16.mxu0 0
      %1300 = vmatpush2.bf16.msra.mxu0 0
      %1301 = vmatprep.subr.bf16.mxu0 0
      %1302 = vmatpush2.bf16.msra.mxu0 0
      %1303 = vmatprep.mubr.bf16.mxu0 0
      %1304 = vmatmul.mubr.bf16.gmra.mxu0 %v1199
      %v1305 = vpop.f32.mrf.mxu0
      %v1306 = vadd.f32 0.0, %v1305
      %v1307 = vpop.f32.mrf.mxu0
      %v1308 = vpop.f32.mrf.mxu0
      %v1309 = vadd.f32 0.0, %v1308
      %v1310 = vpop.f32.mrf.mxu0
      %1311 = vmatprep.mubr.bf16.mxu0 0
      %1312 = vmatmul.mubr.bf16.gmra.mxu0 %v1200
      %v1313 = vpop.f32.mrf.mxu0
      %v1314 = vadd.f32 0.0, %v1313
      %v1315 = vpop.f32.mrf.mxu0
      %v1316 = vpop.f32.mrf.mxu0
      %v1317 = vadd.f32 0.0, %v1316
      %v1318 = vpop.f32.mrf.mxu0
      %1319 = vmatprep.mubr.bf16.mxu0 0
      %1320 = vmatmul.mubr.bf16.gmra.mxu0 %v1201
      %v1321 = vpop.f32.mrf.mxu0
      %v1322 = vadd.f32 0.0, %v1321
      %v1323 = vpop.f32.mrf.mxu0
      %v1324 = vpop.f32.mrf.mxu0
      %v1325 = vadd.f32 0.0, %v1324
      %v1326 = vpop.f32.mrf.mxu0
      %1327 = vmatprep.mubr.bf16.mxu0 0
      %1328 = vmatmul.mubr.bf16.gmra.mxu0 %v1202
      %v1329 = vpop.f32.mrf.mxu0
      %v1330 = vadd.f32 0.0, %v1329
      %v1331 = vpop.f32.mrf.mxu0
      %v1332 = vpop.f32.mrf.mxu0
      %v1333 = vadd.f32 0.0, %v1332
      %v1334 = vpop.f32.mrf.mxu0
      %1335 = vmatprep.mubr.bf16.mxu0 0
      %1336 = vmatmul.mubr.bf16.gmra.mxu0 %v1203
      %v1337 = vpop.f32.mrf.mxu0
      %v1338 = vadd.f32 0.0, %v1337
      %v1339 = vpop.f32.mrf.mxu0
      %v1340 = vpop.f32.mrf.mxu0
      %v1341 = vadd.f32 0.0, %v1340
      %v1342 = vpop.f32.mrf.mxu0
      %1343 = vmatprep.mubr.bf16.mxu0 0
      %1344 = vmatmul.mubr.bf16.gmra.mxu0 %v1204
      %v1345 = vpop.f32.mrf.mxu0
      %v1346 = vadd.f32 0.0, %v1345
      %v1347 = vpop.f32.mrf.mxu0
      %v1348 = vpop.f32.mrf.mxu0
      %v1349 = vadd.f32 0.0, %v1348
      %v1350 = vpop.f32.mrf.mxu0
      %1351 = vmatprep.mubr.bf16.mxu0 0
      %1352 = vmatmul.mubr.bf16.gmra.mxu0 %v1205
      %v1353 = vpop.f32.mrf.mxu0
      %v1354 = vadd.f32 0.0, %v1353
      %v1355 = vpop.f32.mrf.mxu0
      %v1356 = vpop.f32.mrf.mxu0
      %v1357 = vadd.f32 0.0, %v1356
      %v1358 = vpop.f32.mrf.mxu0
      %1359 = vmatprep.mubr.bf16.mxu0 0
      %1360 = vmatmul.mubr.bf16.gmra.mxu0 %v1206
      %v1361 = vpop.f32.mrf.mxu0
      %v1362 = vadd.f32 0.0, %v1361
      %v1363 = vpop.f32.mrf.mxu0
      %v1364 = vpop.f32.mrf.mxu0
      %v1365 = vadd.f32 0.0, %v1364
      %v1366 = vpop.f32.mrf.mxu0
      %1367 = vdwg.mxu0
      %v1368 = vpack.c.bf16 %v1309, %v1306
      %v1369 = vpack.c.bf16 %v1317, %v1314
      %v1370 = vpack.c.bf16 %v1325, %v1322
      %v1371 = vpack.c.bf16 %v1333, %v1330
      %v1372 = vpack.c.bf16 %v1341, %v1338
      %v1373 = vpack.c.bf16 %v1349, %v1346
      %v1374 = vpack.c.bf16 %v1357, %v1354
      %v1375 = vpack.c.bf16 %v1365, %v1362
      %v1376 = vld [vmem:[%s7] sm:$0x1]
      %v1378 = vlaneseq
      %v1379 = vshrl.u32 %v1378, 7
      %v1380 = vsub.s32 0, %v1379
      %v1381 = vrot.slane %v1376, %v1380
      %1383 = vmatprep.subr.bf16.mxu0 0
      %1384 = vmatpush1.bf16.msra.mxu0 %v1375
      %1385 = vmatprep.subr.bf16.mxu0 0
      %1386 = vmatpush1.bf16.msra.mxu0 %v1374
      %1387 = vmatprep.subr.bf16.mxu0 0
      %1388 = vmatpush1.bf16.msra.mxu0 %v1373
      %1389 = vmatprep.subr.bf16.mxu0 0
      %1390 = vmatpush1.bf16.msra.mxu0 %v1372
      %1391 = vmatprep.subr.bf16.mxu0 0
      %1392 = vmatpush1.bf16.msra.mxu0 %v1371
      %1393 = vmatprep.subr.bf16.mxu0 0
      %1394 = vmatpush1.bf16.msra.mxu0 %v1370
      %1395 = vmatprep.subr.bf16.mxu0 0
      %1396 = vmatpush1.bf16.msra.mxu0 %v1369
      %1397 = vmatprep.subr.bf16.mxu0 0
      %1398 = vmatpush1.bf16.msra.mxu0 %v1368
      %1399 = vmatprep.subr.bf16.mxu0 0
      %1400 = vmatpush2.bf16.msra.mxu0 0
      %1401 = vmatprep.subr.bf16.mxu0 0
      %1402 = vmatpush2.bf16.msra.mxu0 0
      %1403 = vmatprep.subr.bf16.mxu0 0
      %1404 = vmatpush2.bf16.msra.mxu0 0
      %1405 = vmatprep.subr.bf16.mxu0 0
      %1406 = vmatpush2.bf16.msra.mxu0 0
      %1407 = vmatprep.subr.bf16.mxu0 0
      %1408 = vmatpush2.bf16.msra.mxu0 0
      %1409 = vmatprep.subr.bf16.mxu0 0
      %1410 = vmatpush2.bf16.msra.mxu0 0
      %1411 = vmatprep.subr.bf16.mxu0 0
      %1412 = vmatpush2.bf16.msra.mxu0 0
      %1413 = vmatprep.subr.bf16.mxu0 0
      %1414 = vmatpush2.bf16.msra.mxu0 0
      %1415 = vmatprep.mubr.bf16.mxu0 0
      %1416 = vmatmul.mubr.bf16.gmra.mxu0 %v1070
      %v1417 = vpop.f32.mrf.mxu0
      %v1418 = vadd.f32 %v1381, %v1417
      %v1419 = vpop.f32.mrf.mxu0
      %v1420 = vpop.f32.mrf.mxu0
      %v1421 = vadd.f32 %v1381, %v1420
      %v1422 = vpop.f32.mrf.mxu0
      %1423 = vmatprep.mubr.bf16.mxu0 0
      %1424 = vmatmul.mubr.bf16.gmra.mxu0 %v1071
      %v1425 = vpop.f32.mrf.mxu0
      %v1426 = vadd.f32 %v1381, %v1425
      %v1427 = vpop.f32.mrf.mxu0
      %v1428 = vpop.f32.mrf.mxu0
      %v1429 = vadd.f32 %v1381, %v1428
      %v1430 = vpop.f32.mrf.mxu0
      %1431 = vmatprep.mubr.bf16.mxu0 0
      %1432 = vmatmul.mubr.bf16.gmra.mxu0 %v1072
      %v1433 = vpop.f32.mrf.mxu0
      %v1434 = vadd.f32 %v1381, %v1433
      %v1435 = vpop.f32.mrf.mxu0
      %v1436 = vpop.f32.mrf.mxu0
      %v1437 = vadd.f32 %v1381, %v1436
      %v1438 = vpop.f32.mrf.mxu0
      %1439 = vmatprep.mubr.bf16.mxu0 0
      %1440 = vmatmul.mubr.bf16.gmra.mxu0 %v1073
      %v1441 = vpop.f32.mrf.mxu0
      %v1442 = vadd.f32 %v1381, %v1441
      %v1443 = vpop.f32.mrf.mxu0
      %v1444 = vpop.f32.mrf.mxu0
      %v1445 = vadd.f32 %v1381, %v1444
      %v1446 = vpop.f32.mrf.mxu0
      %1447 = vmatprep.mubr.bf16.mxu0 0
      %1448 = vmatmul.mubr.bf16.gmra.mxu0 %v1074
      %v1449 = vpop.f32.mrf.mxu0
      %v1450 = vadd.f32 %v1381, %v1449
      %v1451 = vpop.f32.mrf.mxu0
      %v1452 = vpop.f32.mrf.mxu0
      %v1453 = vadd.f32 %v1381, %v1452
      %v1454 = vpop.f32.mrf.mxu0
      %1455 = vmatprep.mubr.bf16.mxu0 0
      %1456 = vmatmul.mubr.bf16.gmra.mxu0 %v1075
      %v1457 = vpop.f32.mrf.mxu0
      %v1458 = vadd.f32 %v1381, %v1457
      %v1459 = vpop.f32.mrf.mxu0
      %v1460 = vpop.f32.mrf.mxu0
      %v1461 = vadd.f32 %v1381, %v1460
      %v1462 = vpop.f32.mrf.mxu0
      %1463 = vmatprep.mubr.bf16.mxu0 0
      %1464 = vmatmul.mubr.bf16.gmra.mxu0 %v1076
      %v1465 = vpop.f32.mrf.mxu0
      %v1466 = vadd.f32 %v1381, %v1465
      %v1467 = vpop.f32.mrf.mxu0
      %v1468 = vpop.f32.mrf.mxu0
      %v1469 = vadd.f32 %v1381, %v1468
      %v1470 = vpop.f32.mrf.mxu0
      %1471 = vmatprep.mubr.bf16.mxu0 0
      %1472 = vmatmul.mubr.bf16.gmra.mxu0 %v1077
      %v1473 = vpop.f32.mrf.mxu0
      %v1474 = vadd.f32 %v1381, %v1473
      %v1475 = vpop.f32.mrf.mxu0
      %v1476 = vpop.f32.mrf.mxu0
      %v1477 = vadd.f32 %v1381, %v1476
      %v1478 = vpop.f32.mrf.mxu0
      %1479 = vdwg.mxu0
      %v1480 = vmax.f32 %v1418, 0.0
      %v1481 = vmax.f32 %v1421, 0.0
      %v1482 = vmax.f32 %v1426, 0.0
      %v1483 = vmax.f32 %v1429, 0.0
      %v1484 = vmax.f32 %v1434, 0.0
      %v1485 = vmax.f32 %v1437, 0.0
      %v1486 = vmax.f32 %v1442, 0.0
      %v1487 = vmax.f32 %v1445, 0.0
      %v1488 = vmax.f32 %v1450, 0.0
      %v1489 = vmax.f32 %v1453, 0.0
      %v1490 = vmax.f32 %v1458, 0.0
      %v1491 = vmax.f32 %v1461, 0.0
      %v1492 = vmax.f32 %v1466, 0.0
      %v1493 = vmax.f32 %v1469, 0.0
      %v1494 = vmax.f32 %v1474, 0.0
      %v1495 = vmax.f32 %v1477, 0.0
      %v1496 = vpack.c.bf16 %v1481, %v1480
      %v1497 = vpack.c.bf16 %v1483, %v1482
      %v1498 = vpack.c.bf16 %v1485, %v1484
      %v1499 = vpack.c.bf16 %v1487, %v1486
      %v1500 = vpack.c.bf16 %v1489, %v1488
      %v1501 = vpack.c.bf16 %v1491, %v1490
      %v1502 = vpack.c.bf16 %v1493, %v1492
      %v1503 = vpack.c.bf16 %v1495, %v1494
      %v1504 = vld [vmem:[#allocation14] sm:$0xf]
      %v1505 = vld [vmem:[#allocation14 + $0x4] sm:$0xf]
      %v1506 = vld [vmem:[#allocation14 + $0x8] sm:$0xf]
      %v1507 = vld [vmem:[#allocation14 + $0xc] sm:$0xf]
      %v1508 = vld [vmem:[#allocation14 + $0x10] sm:$0xf]
      %v1509 = vld [vmem:[#allocation14 + $0x14] sm:$0xf]
      %v1510 = vld [vmem:[#allocation14 + $0x18] sm:$0xf]
      %v1511 = vld [vmem:[#allocation14 + $0x1c] sm:$0xf]
      %v1512 = vld [vmem:[#allocation14 + $0x20] sm:$0xf]
      %v1513 = vld [vmem:[#allocation14 + $0x24] sm:$0xf]
      %v1514 = vld [vmem:[#allocation14 + $0x28] sm:$0xf]
      %v1515 = vld [vmem:[#allocation14 + $0x2c] sm:$0xf]
      %v1516 = vld [vmem:[#allocation14 + $0x30] sm:$0xf]
      %v1517 = vld [vmem:[#allocation14 + $0x34] sm:$0xf]
      %v1518 = vld [vmem:[#allocation14 + $0x38] sm:$0xf]
      %v1519 = vld [vmem:[#allocation14 + $0x3c] sm:$0xf]
      %v1536 = vunpack.c.l.b16 %v1504
      %v1537 = vunpack.c.l.b16 %v1505
      %v1538 = vunpack.c.l.b16 %v1506
      %v1539 = vunpack.c.l.b16 %v1507
      %v1540 = vunpack.c.l.b16 %v1508
      %v1541 = vunpack.c.l.b16 %v1509
      %v1542 = vunpack.c.l.b16 %v1510
      %v1543 = vunpack.c.l.b16 %v1511
      %v1544 = vunpack.c.l.b16 %v1512
      %v1545 = vunpack.c.l.b16 %v1513
      %v1546 = vunpack.c.l.b16 %v1514
      %v1547 = vunpack.c.l.b16 %v1515
      %v1548 = vunpack.c.l.b16 %v1516
      %v1549 = vunpack.c.l.b16 %v1517
      %v1550 = vunpack.c.l.b16 %v1518
      %v1551 = vunpack.c.l.b16 %v1519
      %v1552 = vpack.c.b16 %v1537, %v1536
      %v1553 = vpack.c.b16 %v1539, %v1538
      %v1554 = vpack.c.b16 %v1541, %v1540
      %v1555 = vpack.c.b16 %v1543, %v1542
      %v1556 = vpack.c.b16 %v1545, %v1544
      %v1557 = vpack.c.b16 %v1547, %v1546
      %v1558 = vpack.c.b16 %v1549, %v1548
      %v1559 = vpack.c.b16 %v1551, %v1550
      %1568 = vmatprep.subr.bf16.mxu0 0
      %1569 = vmatpush1.bf16.msra.mxu0 %v1559
      %1570 = vmatprep.subr.bf16.mxu0 0
      %1571 = vmatpush1.bf16.msra.mxu0 %v1558
      %1572 = vmatprep.subr.bf16.mxu0 0
      %1573 = vmatpush1.bf16.msra.mxu0 %v1557
      %1574 = vmatprep.subr.bf16.mxu0 0
      %1575 = vmatpush1.bf16.msra.mxu0 %v1556
      %1576 = vmatprep.subr.bf16.mxu0 0
      %1577 = vmatpush1.bf16.msra.mxu0 %v1555
      %1578 = vmatprep.subr.bf16.mxu0 0
      %1579 = vmatpush1.bf16.msra.mxu0 %v1554
      %1580 = vmatprep.subr.bf16.mxu0 0
      %1581 = vmatpush1.bf16.msra.mxu0 %v1553
      %1582 = vmatprep.subr.bf16.mxu0 0
      %1583 = vmatpush1.bf16.msra.mxu0 %v1552
      %1584 = vmatprep.subr.bf16.mxu0 0
      %1585 = vmatpush2.bf16.msra.mxu0 0
      %1586 = vmatprep.subr.bf16.mxu0 0
      %1587 = vmatpush2.bf16.msra.mxu0 0
      %1588 = vmatprep.subr.bf16.mxu0 0
      %1589 = vmatpush2.bf16.msra.mxu0 0
      %1590 = vmatprep.subr.bf16.mxu0 0
      %1591 = vmatpush2.bf16.msra.mxu0 0
      %1592 = vmatprep.subr.bf16.mxu0 0
      %1593 = vmatpush2.bf16.msra.mxu0 0
      %1594 = vmatprep.subr.bf16.mxu0 0
      %1595 = vmatpush2.bf16.msra.mxu0 0
      %1596 = vmatprep.subr.bf16.mxu0 0
      %1597 = vmatpush2.bf16.msra.mxu0 0
      %1598 = vmatprep.subr.bf16.mxu0 0
      %1599 = vmatpush2.bf16.msra.mxu0 0
      %1600 = vmatprep.mubr.bf16.mxu0 0
      %1601 = vmatmul.mubr.bf16.gmra.mxu0 %v1496
      %v1602 = vpop.f32.mrf.mxu0
      %v1603 = vadd.f32 0.0, %v1602
      %v1604 = vpop.f32.mrf.mxu0
      %v1605 = vpop.f32.mrf.mxu0
      %v1606 = vadd.f32 0.0, %v1605
      %v1607 = vpop.f32.mrf.mxu0
      %1608 = vmatprep.mubr.bf16.mxu0 0
      %1609 = vmatmul.mubr.bf16.gmra.mxu0 %v1497
      %v1610 = vpop.f32.mrf.mxu0
      %v1611 = vadd.f32 0.0, %v1610
      %v1612 = vpop.f32.mrf.mxu0
      %v1613 = vpop.f32.mrf.mxu0
      %v1614 = vadd.f32 0.0, %v1613
      %v1615 = vpop.f32.mrf.mxu0
      %1616 = vmatprep.mubr.bf16.mxu0 0
      %1617 = vmatmul.mubr.bf16.gmra.mxu0 %v1498
      %v1618 = vpop.f32.mrf.mxu0
      %v1619 = vadd.f32 0.0, %v1618
      %v1620 = vpop.f32.mrf.mxu0
      %v1621 = vpop.f32.mrf.mxu0
      %v1622 = vadd.f32 0.0, %v1621
      %v1623 = vpop.f32.mrf.mxu0
      %1624 = vmatprep.mubr.bf16.mxu0 0
      %1625 = vmatmul.mubr.bf16.gmra.mxu0 %v1499
      %v1626 = vpop.f32.mrf.mxu0
      %v1627 = vadd.f32 0.0, %v1626
      %v1628 = vpop.f32.mrf.mxu0
      %v1629 = vpop.f32.mrf.mxu0
      %v1630 = vadd.f32 0.0, %v1629
      %v1631 = vpop.f32.mrf.mxu0
      %1632 = vmatprep.mubr.bf16.mxu0 0
      %1633 = vmatmul.mubr.bf16.gmra.mxu0 %v1500
      %v1634 = vpop.f32.mrf.mxu0
      %v1635 = vadd.f32 0.0, %v1634
      %v1636 = vpop.f32.mrf.mxu0
      %v1637 = vpop.f32.mrf.mxu0
      %v1638 = vadd.f32 0.0, %v1637
      %v1639 = vpop.f32.mrf.mxu0
      %1640 = vmatprep.mubr.bf16.mxu0 0
      %1641 = vmatmul.mubr.bf16.gmra.mxu0 %v1501
      %v1642 = vpop.f32.mrf.mxu0
      %v1643 = vadd.f32 0.0, %v1642
      %v1644 = vpop.f32.mrf.mxu0
      %v1645 = vpop.f32.mrf.mxu0
      %v1646 = vadd.f32 0.0, %v1645
      %v1647 = vpop.f32.mrf.mxu0
      %1648 = vmatprep.mubr.bf16.mxu0 0
      %1649 = vmatmul.mubr.bf16.gmra.mxu0 %v1502
      %v1650 = vpop.f32.mrf.mxu0
      %v1651 = vadd.f32 0.0, %v1650
      %v1652 = vpop.f32.mrf.mxu0
      %v1653 = vpop.f32.mrf.mxu0
      %v1654 = vadd.f32 0.0, %v1653
      %v1655 = vpop.f32.mrf.mxu0
      %1656 = vmatprep.mubr.bf16.mxu0 0
      %1657 = vmatmul.mubr.bf16.gmra.mxu0 %v1503
      %v1658 = vpop.f32.mrf.mxu0
      %v1659 = vadd.f32 0.0, %v1658
      %v1660 = vpop.f32.mrf.mxu0
      %v1661 = vpop.f32.mrf.mxu0
      %v1662 = vadd.f32 0.0, %v1661
      %v1663 = vpop.f32.mrf.mxu0
      %1664 = vdwg.mxu0
      %v1665 = vpack.c.bf16 %v1606, %v1603
      %v1666 = vpack.c.bf16 %v1614, %v1611
      %v1667 = vpack.c.bf16 %v1622, %v1619
      %v1668 = vpack.c.bf16 %v1630, %v1627
      %v1669 = vpack.c.bf16 %v1638, %v1635
      %v1670 = vpack.c.bf16 %v1646, %v1643
      %v1671 = vpack.c.bf16 %v1654, %v1651
      %v1672 = vpack.c.bf16 %v1662, %v1659
      %v1673 = vld [vmem:[%s9] sm:$0x1]
      %v1675 = vlaneseq
      %v1676 = vshrl.u32 %v1675, 7
      %v1677 = vsub.s32 0, %v1676
      %v1678 = vrot.slane %v1673, %v1677
      %1680 = vmatprep.subr.bf16.mxu0 0
      %1681 = vmatpush1.bf16.msra.mxu0 %v1672
      %1682 = vmatprep.subr.bf16.mxu0 0
      %1683 = vmatpush1.bf16.msra.mxu0 %v1671
      %1684 = vmatprep.subr.bf16.mxu0 0
      %1685 = vmatpush1.bf16.msra.mxu0 %v1670
      %1686 = vmatprep.subr.bf16.mxu0 0
      %1687 = vmatpush1.bf16.msra.mxu0 %v1669
      %1688 = vmatprep.subr.bf16.mxu0 0
      %1689 = vmatpush1.bf16.msra.mxu0 %v1668
      %1690 = vmatprep.subr.bf16.mxu0 0
      %1691 = vmatpush1.bf16.msra.mxu0 %v1667
      %1692 = vmatprep.subr.bf16.mxu0 0
      %1693 = vmatpush1.bf16.msra.mxu0 %v1666
      %1694 = vmatprep.subr.bf16.mxu0 0
      %1695 = vmatpush1.bf16.msra.mxu0 %v1665
      %1696 = vmatprep.subr.bf16.mxu0 0
      %1697 = vmatpush2.bf16.msra.mxu0 0
      %1698 = vmatprep.subr.bf16.mxu0 0
      %1699 = vmatpush2.bf16.msra.mxu0 0
      %1700 = vmatprep.subr.bf16.mxu0 0
      %1701 = vmatpush2.bf16.msra.mxu0 0
      %1702 = vmatprep.subr.bf16.mxu0 0
      %1703 = vmatpush2.bf16.msra.mxu0 0
      %1704 = vmatprep.subr.bf16.mxu0 0
      %1705 = vmatpush2.bf16.msra.mxu0 0
      %1706 = vmatprep.subr.bf16.mxu0 0
      %1707 = vmatpush2.bf16.msra.mxu0 0
      %1708 = vmatprep.subr.bf16.mxu0 0
      %1709 = vmatpush2.bf16.msra.mxu0 0
      %1710 = vmatprep.subr.bf16.mxu0 0
      %1711 = vmatpush2.bf16.msra.mxu0 0
      %1712 = vmatprep.mubr.bf16.mxu0 0
      %1713 = vmatmul.mubr.bf16.gmra.mxu0 %v1070
      %v1714 = vpop.f32.mrf.mxu0
      %v1715 = vadd.f32 %v1678, %v1714
      %v1716 = vpop.f32.mrf.mxu0
      %v1717 = vpop.f32.mrf.mxu0
      %v1718 = vadd.f32 %v1678, %v1717
      %v1719 = vpop.f32.mrf.mxu0
      %1720 = vmatprep.mubr.bf16.mxu0 0
      %1721 = vmatmul.mubr.bf16.gmra.mxu0 %v1071
      %v1722 = vpop.f32.mrf.mxu0
      %v1723 = vadd.f32 %v1678, %v1722
      %v1724 = vpop.f32.mrf.mxu0
      %v1725 = vpop.f32.mrf.mxu0
      %v1726 = vadd.f32 %v1678, %v1725
      %v1727 = vpop.f32.mrf.mxu0
      %1728 = vmatprep.mubr.bf16.mxu0 0
      %1729 = vmatmul.mubr.bf16.gmra.mxu0 %v1072
      %v1730 = vpop.f32.mrf.mxu0
      %v1731 = vadd.f32 %v1678, %v1730
      %v1732 = vpop.f32.mrf.mxu0
      %v1733 = vpop.f32.mrf.mxu0
      %v1734 = vadd.f32 %v1678, %v1733
      %v1735 = vpop.f32.mrf.mxu0
      %1736 = vmatprep.mubr.bf16.mxu0 0
      %1737 = vmatmul.mubr.bf16.gmra.mxu0 %v1073
      %v1738 = vpop.f32.mrf.mxu0
      %v1739 = vadd.f32 %v1678, %v1738
      %v1740 = vpop.f32.mrf.mxu0
      %v1741 = vpop.f32.mrf.mxu0
      %v1742 = vadd.f32 %v1678, %v1741
      %v1743 = vpop.f32.mrf.mxu0
      %1744 = vmatprep.mubr.bf16.mxu0 0
      %1745 = vmatmul.mubr.bf16.gmra.mxu0 %v1074
      %v1746 = vpop.f32.mrf.mxu0
      %v1747 = vadd.f32 %v1678, %v1746
      %v1748 = vpop.f32.mrf.mxu0
      %v1749 = vpop.f32.mrf.mxu0
      %v1750 = vadd.f32 %v1678, %v1749
      %v1751 = vpop.f32.mrf.mxu0
      %1752 = vmatprep.mubr.bf16.mxu0 0
      %1753 = vmatmul.mubr.bf16.gmra.mxu0 %v1075
      %v1754 = vpop.f32.mrf.mxu0
      %v1755 = vadd.f32 %v1678, %v1754
      %v1756 = vpop.f32.mrf.mxu0
      %v1757 = vpop.f32.mrf.mxu0
      %v1758 = vadd.f32 %v1678, %v1757
      %v1759 = vpop.f32.mrf.mxu0
      %1760 = vmatprep.mubr.bf16.mxu0 0
      %1761 = vmatmul.mubr.bf16.gmra.mxu0 %v1076
      %v1762 = vpop.f32.mrf.mxu0
      %v1763 = vadd.f32 %v1678, %v1762
      %v1764 = vpop.f32.mrf.mxu0
      %v1765 = vpop.f32.mrf.mxu0
      %v1766 = vadd.f32 %v1678, %v1765
      %v1767 = vpop.f32.mrf.mxu0
      %1768 = vmatprep.mubr.bf16.mxu0 0
      %1769 = vmatmul.mubr.bf16.gmra.mxu0 %v1077
      %v1770 = vpop.f32.mrf.mxu0
      %v1771 = vadd.f32 %v1678, %v1770
      %v1772 = vpop.f32.mrf.mxu0
      %v1773 = vpop.f32.mrf.mxu0
      %v1774 = vadd.f32 %v1678, %v1773
      %v1775 = vpop.f32.mrf.mxu0
      %1776 = vdwg.mxu0
      %1777 = vst [vmem:[#allocation16] sm:$0xff] %v1715
      %1778 = vst [vmem:[#allocation16 + $0x8] sm:$0xff] %v1718
      %1779 = vst [vmem:[#allocation16 + $0x10] sm:$0xff] %v1723
      %1780 = vst [vmem:[#allocation16 + $0x18] sm:$0xff] %v1726
      %1781 = vst [vmem:[#allocation16 + $0x20] sm:$0xff] %v1731
      %1782 = vst [vmem:[#allocation16 + $0x28] sm:$0xff] %v1734
      %1783 = vst [vmem:[#allocation16 + $0x30] sm:$0xff] %v1739
      %1784 = vst [vmem:[#allocation16 + $0x38] sm:$0xff] %v1742
      %1785 = vst [vmem:[#allocation16 + $0x40] sm:$0xff] %v1747
      %1786 = vst [vmem:[#allocation16 + $0x48] sm:$0xff] %v1750
      %1787 = vst [vmem:[#allocation16 + $0x50] sm:$0xff] %v1755
      %1788 = vst [vmem:[#allocation16 + $0x58] sm:$0xff] %v1758
      %1789 = vst [vmem:[#allocation16 + $0x60] sm:$0xff] %v1763
      %1790 = vst [vmem:[#allocation16 + $0x68] sm:$0xff] %v1766
      %1791 = vst [vmem:[#allocation16 + $0x70] sm:$0xff] %v1771
      %1792 = vst [vmem:[#allocation16 + $0x78] sm:$0xff] %v1774
    $region73: #{tpu_custom_call.1} parent=1 // pred_fallthru
      _
    // Predicated region
    $region74: #{tpu_custom_call.1} parent=1 // pred_check
      _
    $region75: #{tpu_custom_call.1} parent=1 // pred_check_branch
      %1794 = sbr.rel (0) target = $region77
    $region76: #{tpu_custom_call.1} parent=1 // pred_region
      %s1796 = ssub.s32 2048, 2048
      %1797 = vsyncadd [#allocation7], %s1796
      %s1798 = sshll.u32 [#allocation16], 4
      %s1799 = int_to_ptr.vmem [resolvable:$true] %s1798
      %1804 = dma.vmem_to_hbm [thread:$0]  %s1799, 2048, %s10, [#allocation7], 128, 128, 8
    $region77: #{tpu_custom_call.1} parent=1 // pred_fallthru
      _
    // Predicated region
    $region78: #{tpu_custom_call.1} parent=1 // pred_check
      _
    $region79: #{tpu_custom_call.1} parent=1 // pred_check_branch
      %1806 = sbr.rel (0) target = $region81
    $region80: #{tpu_custom_call.1} parent=1 // pred_region
      %1807 = dma.done [#allocation7], 2048
    $region81: #{tpu_custom_call.1} parent=1 // pred_fallthru
      _
    %1808 = vsyncpa [#allocation6], 1
    %1809 = vsyncpa [#allocation9], 1
    %1810 = vsyncpa [#allocation12], 1
    %1811 = vsyncpa [#allocation15], 1
    %1812 = vsyncpa [#allocation7], 1

</llo_original>
